<compile_context>
chip_gen: v7x
topology: tpu7x:2x2x1
jax: 0.10.0
libtpu: 0.0.40
codegen_flags: <defaults>
</compile_context>

<pallas_src>
import functools

import jax
import jax.numpy as jnp
from jax import lax
from jax.experimental import pallas as pl
from jax.experimental.pallas import tpu as pltpu


# ----------------------------- Pallas kernel -------------------------------
def _make_shifter(src, margin):
    """Return shift(off) with shift(off)[:, p] == src[:, p + off] (zeros OOB)."""
    c, n = src.shape
    z = jnp.zeros((c, margin), src.dtype)
    buf = jnp.concatenate([z, src, z], axis=1)

    def shift(off):
        if off == 0:
            return src
        s = margin + off
        return buf[:, s:s + n]

    return shift


def inception_kernel(x_ref, mask_ref, wred_ref, sred_ref, tred_ref,
                     wbig_ref, sall_ref, tall_ref, o_ref, cols_ref,
                     *, Wp, Cr3, Cr5):
    Cin = x_ref.shape[1]

    xb = x_ref[0]                                # (Cin, ML) bf16, padded grid
    xf = xb.astype(jnp.float32)
    mask = mask_ref[...]                         # (1, ML) f32: 1 interior, 0 halo/tail

    # ---- stage 1: fused 1x1 reduce convs on the MXU (channels x lanes) -----
    z = jnp.dot(wred_ref[...], xb, preferred_element_type=jnp.float32)
    r = jnp.maximum(z * sred_ref[...] + tred_ref[...], 0.0) * mask   # zero halo
    r3 = r[:Cr3]
    r5 = r[Cr3:Cr3 + Cr5]

    # ---- build the block-diagonal im2col matrix (K rows x M lanes) ---------
    row = 0
    cols_ref[pl.ds(row, Cin), :] = xb                               # 1x1 branch
    row += Cin

    sh3 = _make_shifter(r3, Wp + 1)                                 # 3x3 branch
    for dh in range(3):
        for dw in range(3):
            tap = sh3((dh - 1) * Wp + (dw - 1))
            cols_ref[pl.ds(row, Cr3), :] = tap.astype(jnp.bfloat16)
            row += Cr3

    sh5 = _make_shifter(r5, 2 * Wp + 2)                             # 5x5 branch
    for dh in range(5):
        for dw in range(5):
            tap = sh5((dh - 2) * Wp + (dw - 2))
            cols_ref[pl.ds(row, Cr5), :] = tap.astype(jnp.bfloat16)
            row += Cr5

    # ---- separable 3x3 max-pool (halo acts as -inf padding) ----------------
    xneg = jnp.where(mask > 0.0, xf, -1e30)
    shx = _make_shifter(xneg, 2)
    rowmax = jnp.maximum(jnp.maximum(shx(-1), xneg), shx(1))
    shy = _make_shifter(rowmax, Wp)
    mx = jnp.maximum(jnp.maximum(shy(-Wp), rowmax), shy(Wp))
    mx = jnp.where(mask > 0.0, mx, 0.0)                             # keep finite
    cols_ref[pl.ds(row, Cin), :] = mx.astype(jnp.bfloat16)

    # ---- stage 2: one block-diagonal matmul -> all branch channels ---------
    y = jnp.dot(wbig_ref[...], cols_ref[...],
                preferred_element_type=jnp.float32)                 # (Ctot, ML)
    o_ref[0] = jnp.maximum(y * sall_ref[...] + tall_ref[...], 0.0)


# ------------------------------- wrapper ------------------------------------
def inception_block(x_nchw, p):
    """x_nchw: (N, Cin, H, W) float32.  Returns (N, Ctot, H, W) like PyTorch."""
    N, Cin, H, W = x_nchw.shape
    C1 = p['w1'].shape[3]
    Cr3, C3 = p['w3'].shape[2], p['w3'].shape[3]
    Cr5, C5 = p['w5'].shape[2], p['w5'].shape[3]
    Cm = p['wm'].shape[3]
    Ctot = C1 + C3 + C5 + Cm
    Kbig = Cin + 9 * Cr3 + 25 * Cr5 + Cin

    PAD = 2                                       # common grid padding (5x5 conv)
    Hp, Wp = H + 2 * PAD, W + 2 * PAD
    Mp = Hp * Wp
    ML = ((Mp + 127) // 128) * 128                # lane-dense padded length

    # zero-padded, flattened, lane-padded input on the common grid (bf16)
    xp = jnp.pad(x_nchw.astype(jnp.float32),
                 ((0, 0), (0, 0), (PAD, PAD), (PAD, PAD))).reshape(N, Cin, Mp)
    xp = jnp.pad(xp, ((0, 0), (0, 0), (0, ML - Mp))).astype(jnp.bfloat16)

    mask2d = jnp.zeros((Hp, Wp), jnp.float32).at[PAD:PAD + H, PAD:PAD + W].set(1.0)
    mask = jnp.pad(mask2d.reshape(1, Mp), ((0, 0), (0, ML - Mp)))

    # fused stage-1 weights, transposed: (Cr3+Cr5, Cin)
    w_red = jnp.concatenate([p['w3r'].reshape(Cin, Cr3),
                             p['w5r'].reshape(Cin, Cr5)], axis=1).T
    s_red = jnp.concatenate([p['s3r'], p['s5r']], axis=1).T          # (Cr3+Cr5, 1)
    t_red = jnp.concatenate([p['t3r'], p['t5r']], axis=1).T

    # block-diagonal stage-2 weights, transposed: (Ctot, Kbig)
    r0, r1, r2 = Cin, Cin + 9 * Cr3, Cin + 9 * Cr3 + 25 * Cr5
    c0, c1, c2 = C1, C1 + C3, C1 + C3 + C5
    w_big = jnp.zeros((Kbig, Ctot), jnp.float32)
    w_big = w_big.at[0:r0, 0:c0].set(p['w1'].reshape(Cin, C1))
    w_big = w_big.at[r0:r1, c0:c1].set(p['w3'].reshape(9 * Cr3, C3))
    w_big = w_big.at[r1:r2, c1:c2].set(p['w5'].reshape(25 * Cr5, C5))
    w_big = w_big.at[r2:Kbig, c2:Ctot].set(p['wm'].reshape(Cin, Cm))
    w_big = w_big.T
    s_all = jnp.concatenate([p['s1'], p['s3'], p['s5'], p['sm']], axis=1).T
    t_all = jnp.concatenate([p['t1'], p['t3'], p['t5'], p['tm']], axis=1).T

    w_red = w_red.astype(jnp.bfloat16)
    w_big = w_big.astype(jnp.bfloat16)

    kern = functools.partial(inception_kernel, Wp=Wp, Cr3=Cr3, Cr5=Cr5)

    flops = 2 * N * Mp * (Cin * (Cr3 + Cr5) + Kbig * Ctot)
    bytes_accessed = (xp.size * 2 + N * Ctot * ML * 4
                      + w_red.size * 2 + w_big.size * 2
                      + (s_red.size + t_red.size + s_all.size + t_all.size
                         + mask.size) * 4)

    out = pl.pallas_call(
        kern,
        out_shape=jax.ShapeDtypeStruct((N, Ctot, ML), jnp.float32),
        grid_spec=pltpu.PrefetchScalarGridSpec(
            num_scalar_prefetch=0,
            grid=(N,),
            in_specs=[
                pl.BlockSpec((1, Cin, ML), lambda b: (b, 0, 0)),
                pl.BlockSpec((1, ML), lambda b: (0, 0)),
                pl.BlockSpec(w_red.shape, lambda b: (0, 0)),
                pl.BlockSpec(s_red.shape, lambda b: (0, 0)),
                pl.BlockSpec(t_red.shape, lambda b: (0, 0)),
                pl.BlockSpec(w_big.shape, lambda b: (0, 0)),
                pl.BlockSpec(s_all.shape, lambda b: (0, 0)),
                pl.BlockSpec(t_all.shape, lambda b: (0, 0)),
            ],
            out_specs=pl.BlockSpec((1, Ctot, ML), lambda b: (b, 0, 0)),
            scratch_shapes=[pltpu.VMEM((Kbig, ML), jnp.bfloat16)],   # im2col
        ),
        compiler_params=pltpu.CompilerParams(
            dimension_semantics=("parallel",),
            vmem_limit_bytes=32 * 1024 * 1024),
        cost_estimate=pl.CostEstimate(flops=flops, transcendentals=0,
                                      bytes_accessed=bytes_accessed),
    )(xp, mask, w_red, s_red, t_red, w_big, s_all, t_all)

    out = out[:, :, :Mp].reshape(N, Ctot, Hp, Wp)
    return out[:, :, PAD:PAD + H, PAD:PAD + W]                       # NCHW


# ----------------------- deterministic parameter setup ----------------------
def make_params(key, c_in, c_red, c_out, eps=1e-5):
    # TODO(synk): BatchNorm training-mode batch statistics (and running-stat
    # updates) are not reproduced; BN is folded in inference form.
    keys = iter(jax.random.split(key, 40))

    def conv(cin, cout, k):
        fan_in = cin * k * k
        bound = 1.0 / (fan_in ** 0.5)
        w = jax.random.uniform(next(keys), (k, k, cin, cout), jnp.float32,
                               -bound, bound)                       # HWIO
        b = jax.random.uniform(next(keys), (cout,), jnp.float32, -bound, bound)
        return w, b

    def bn_fold(b, cout):
        gamma = jax.random.uniform(next(keys), (cout,), jnp.float32, 0.5, 1.5)
        beta = jax.random.uniform(next(keys), (cout,), jnp.float32, -0.5, 0.5)
        mean = jax.random.uniform(next(keys), (cout,), jnp.float32, -0.1, 0.1)
        var = jax.random.uniform(next(keys), (cout,), jnp.float32, 0.5, 1.5)
        s = gamma / jnp.sqrt(var + eps)
        t = beta + (b - mean) * s
        return s.reshape(1, cout), t.reshape(1, cout)

    p = {}
    p['w1'], b1 = conv(c_in, c_out['1x1'], 1)
    p['s1'], p['t1'] = bn_fold(b1, c_out['1x1'])
    p['w3r'], b3r = conv(c_in, c_red['3x3'], 1)
    p['s3r'], p['t3r'] = bn_fold(b3r, c_red['3x3'])
    p['w3'], b3 = conv(c_red['3x3'], c_out['3x3'], 3)
    p['s3'], p['t3'] = bn_fold(b3, c_out['3x3'])
    p['w5r'], b5r = conv(c_in, c_red['5x5'], 1)
    p['s5r'], p['t5r'] = bn_fold(b5r, c_red['5x5'])
    p['w5'], b5 = conv(c_red['5x5'], c_out['5x5'], 5)
    p['s5'], p['t5'] = bn_fold(b5, c_out['5x5'])
    p['wm'], bm = conv(c_in, c_out['max'], 1)
    p['sm'], p['tm'] = bn_fold(bm, c_out['max'])
    return p


# --------------------------- pure-JAX reference ------------------------------
def reference_nhwc(x, rp):
    def cbr(z, w, s, t, pad):
        y = lax.conv_general_dilated(z, w, (1, 1), [(pad, pad), (pad, pad)],
                                     dimension_numbers=('NHWC', 'HWIO', 'NHWC'))
        return jnp.maximum(y * s + t, 0.0)

    y1 = cbr(x, rp['w1'], rp['s1'], rp['t1'], 0)
    y3 = cbr(cbr(x, rp['w3r'], rp['s3r'], rp['t3r'], 0),
             rp['w3'], rp['s3'], rp['t3'], 1)
    y5 = cbr(cbr(x, rp['w5r'], rp['s5r'], rp['t5r'], 0),
             rp['w5'], rp['s5'], rp['t5'], 2)
    mp = lax.reduce_window(x, -jnp.inf, lax.max, (1, 3, 3, 1), (1, 1, 1, 1),
                           [(0, 0), (1, 1), (1, 1), (0, 0)])
    ym = cbr(mp, rp['wm'], rp['sm'], rp['tm'], 0)
    return jnp.concatenate([y1, y3, y5, ym], axis=-1)


if __name__ == "__main__":
    key = jax.random.PRNGKey(0)
    N, Cin, H, W = 2, 4, 16, 16
    c_red = {"3x3": 4, "5x5": 4}
    c_out = {"1x1": 4, "3x3": 8, "5x5": 8, "max": 4}

    kx, kp = jax.random.split(key)
    x_nchw = jax.random.normal(kx, (N, Cin, H, W), jnp.float32)
    params = make_params(kp, Cin, c_red, c_out)

    out = inception_block(x_nchw, params)
    out = jax.block_until_ready(out)

    ref = jnp.transpose(
        reference_nhwc(jnp.transpose(x_nchw, (0, 2, 3, 1)), params),
        (0, 3, 1, 2))
    assert out.shape == (N, sum(c_out.values()), H, W)
    # tolerance accommodates bf16 MXU operands (reference path is pure f32)
    assert jnp.allclose(out, ref, atol=5e-2, rtol=5e-2), \
        float(jnp.max(jnp.abs(out - ref)))
    print("KERNEL_OK")
</pallas_src>

<mosaic_0001>
module attributes {stable_mosaic.version = 11 : i64} {
  func.func @inception_kernel(%arg0: i32, %arg1: memref<1x4x512xbf16, #tpu.memory_space<vmem>>, %arg2: memref<1x512xf32, #tpu.memory_space<vmem>>, %arg3: memref<8x4xbf16, #tpu.memory_space<vmem>>, %arg4: memref<8x1xf32, #tpu.memory_space<vmem>>, %arg5: memref<8x1xf32, #tpu.memory_space<vmem>>, %arg6: memref<24x144xbf16, #tpu.memory_space<vmem>>, %arg7: memref<24x1xf32, #tpu.memory_space<vmem>>, %arg8: memref<24x1xf32, #tpu.memory_space<vmem>>, %arg9: memref<1x24x512xf32, #tpu.memory_space<vmem>>, %arg10: memref<144x512xbf16, #tpu.memory_space<vmem>>) attributes {dimension_semantics = [#tpu.dimension_semantics<parallel>], iteration_bounds = array<i64: 2>, scalar_prefetch = 0 : i64, scratch_operands = 1 : i64, tpu.core_type = #tpu.core_type<tc>, window_params = [{transform_indices = @transform_0, window_bounds = array<i64: 1, 4, 512>}, {pipeline_mode = #tpu.pipeline_mode<synchronous>, transform_indices = @transform_1, window_bounds = array<i64: 1, 512>}, {pipeline_mode = #tpu.pipeline_mode<synchronous>, transform_indices = @transform_2, window_bounds = array<i64: 8, 4>}, {pipeline_mode = #tpu.pipeline_mode<synchronous>, transform_indices = @transform_3, window_bounds = array<i64: 8, 1>}, {pipeline_mode = #tpu.pipeline_mode<synchronous>, transform_indices = @transform_4, window_bounds = array<i64: 8, 1>}, {pipeline_mode = #tpu.pipeline_mode<synchronous>, transform_indices = @transform_5, window_bounds = array<i64: 24, 144>}, {pipeline_mode = #tpu.pipeline_mode<synchronous>, transform_indices = @transform_6, window_bounds = array<i64: 24, 1>}, {pipeline_mode = #tpu.pipeline_mode<synchronous>, transform_indices = @transform_7, window_bounds = array<i64: 24, 1>}, {transform_indices = @transform_8, window_bounds = array<i64: 1, 24, 512>}]} {
    %c0 = arith.constant 0 : index
    %c0_0 = arith.constant 0 : index
    %c0_1 = arith.constant 0 : index
    %0 = vector.load %arg1[%c0, %c0_0, %c0_1] : memref<1x4x512xbf16, #tpu.memory_space<vmem>>, vector<1x4x512xbf16>
    %1 = vector.shape_cast %0 : vector<1x4x512xbf16> to vector<4x512xbf16>
    %2 = arith.extf %1 : vector<4x512xbf16> to vector<4x512xf32>
    %c0_2 = arith.constant 0 : index
    %c0_3 = arith.constant 0 : index
    %3 = vector.load %arg2[%c0_2, %c0_3] : memref<1x512xf32, #tpu.memory_space<vmem>>, vector<1x512xf32>
    %c0_4 = arith.constant 0 : index
    %c0_5 = arith.constant 0 : index
    %4 = vector.load %arg3[%c0_4, %c0_5] : memref<8x4xbf16, #tpu.memory_space<vmem>>, vector<8x4xbf16>
    %cst = arith.constant dense<0.000000e+00> : vector<8x512xf32>
    %5 = tpu.matmul %4, %1, %cst {dimension_numbers = #tpu.dot_dimension_numbers<[1], [0], [0], [1], [0, 0, 1, 1], [], []>} : vector<8x4xbf16>, vector<4x512xbf16>, vector<8x512xf32> -> vector<8x512xf32>
    %c0_6 = arith.constant 0 : index
    %c0_7 = arith.constant 0 : index
    %6 = vector.load %arg4[%c0_6, %c0_7] : memref<8x1xf32, #tpu.memory_space<vmem>>, vector<8x1xf32>
    %7 = vector.broadcast %6 : vector<8x1xf32> to vector<8x512xf32>
    %8 = arith.mulf %5, %7 : vector<8x512xf32>
    %c0_8 = arith.constant 0 : index
    %c0_9 = arith.constant 0 : index
    %9 = vector.load %arg5[%c0_8, %c0_9] : memref<8x1xf32, #tpu.memory_space<vmem>>, vector<8x1xf32>
    %10 = vector.broadcast %9 : vector<8x1xf32> to vector<8x512xf32>
    %11 = arith.addf %8, %10 : vector<8x512xf32>
    %cst_10 = arith.constant 0.000000e+00 : f32
    %12 = vector.broadcast %cst_10 : f32 to vector<8x512xf32>
    %13 = arith.maximumf %11, %12 : vector<8x512xf32>
    %14 = vector.broadcast %3 : vector<1x512xf32> to vector<8x512xf32>
    %15 = arith.mulf %13, %14 : vector<8x512xf32>
    %16 = vector.extract_strided_slice %15 {offsets = [0, 0], sizes = [4, 512], strides = [1, 1]} : vector<8x512xf32> to vector<4x512xf32>
    %17 = vector.extract_strided_slice %15 {offsets = [4, 0], sizes = [4, 512], strides = [1, 1]} : vector<8x512xf32> to vector<4x512xf32>
    %c0_11 = arith.constant 0 : index
    %c0_12 = arith.constant 0 : index
    %18 = vector.load %arg10[%c0_11, %c0_12] : memref<144x512xbf16, #tpu.memory_space<vmem>>, vector<4x512xbf16>
    tpu.vector_store %arg10[%c0_11, %c0_12], %1 {strides = array<i32>} : memref<144x512xbf16, #tpu.memory_space<vmem>>, vector<4x512xbf16>,
    %cst_13 = arith.constant 0.000000e+00 : f32
    %19 = vector.broadcast %cst_13 : f32 to vector<4x21xf32>
    %20 = tpu.concatenate %19, %16, %19 in 1 : vector<4x21xf32>, vector<4x512xf32>, vector<4x21xf32> -> vector<4x554xf32>
    %21 = vector.extract_strided_slice %20 {offsets = [0, 0], sizes = [4, 512], strides = [1, 1]} : vector<4x554xf32> to vector<4x512xf32>
    %22 = arith.truncf %21 : vector<4x512xf32> to vector<4x512xbf16>
    %c4 = arith.constant 4 : index
    %c0_14 = arith.constant 0 : index
    %23 = vector.load %arg10[%c4, %c0_14] : memref<144x512xbf16, #tpu.memory_space<vmem>>, vector<4x512xbf16>
    tpu.vector_store %arg10[%c4, %c0_14], %22 {strides = array<i32>} : memref<144x512xbf16, #tpu.memory_space<vmem>>, vector<4x512xbf16>,
    %24 = vector.extract_strided_slice %20 {offsets = [0, 1], sizes = [4, 512], strides = [1, 1]} : vector<4x554xf32> to vector<4x512xf32>
    %25 = arith.truncf %24 : vector<4x512xf32> to vector<4x512xbf16>
    %c8 = arith.constant 8 : index
    %c0_15 = arith.constant 0 : index
    %26 = vector.load %arg10[%c8, %c0_15] : memref<144x512xbf16, #tpu.memory_space<vmem>>, vector<4x512xbf16>
    tpu.vector_store %arg10[%c8, %c0_15], %25 {strides = array<i32>} : memref<144x512xbf16, #tpu.memory_space<vmem>>, vector<4x512xbf16>,
    %27 = vector.extract_strided_slice %20 {offsets = [0, 2], sizes = [4, 512], strides = [1, 1]} : vector<4x554xf32> to vector<4x512xf32>
    %28 = arith.truncf %27 : vector<4x512xf32> to vector<4x512xbf16>
    %c12 = arith.constant 12 : index
    %c0_16 = arith.constant 0 : index
    %29 = vector.load %arg10[%c12, %c0_16] : memref<144x512xbf16, #tpu.memory_space<vmem>>, vector<4x512xbf16>
    tpu.vector_store %arg10[%c12, %c0_16], %28 {strides = array<i32>} : memref<144x512xbf16, #tpu.memory_space<vmem>>, vector<4x512xbf16>,
    %30 = vector.extract_strided_slice %20 {offsets = [0, 20], sizes = [4, 512], strides = [1, 1]} : vector<4x554xf32> to vector<4x512xf32>
    %31 = arith.truncf %30 : vector<4x512xf32> to vector<4x512xbf16>
    %c16 = arith.constant 16 : index
    %c0_17 = arith.constant 0 : index
    %32 = vector.load %arg10[%c16, %c0_17] : memref<144x512xbf16, #tpu.memory_space<vmem>>, vector<4x512xbf16>
    tpu.vector_store %arg10[%c16, %c0_17], %31 {strides = array<i32>} : memref<144x512xbf16, #tpu.memory_space<vmem>>, vector<4x512xbf16>,
    %33 = arith.truncf %16 : vector<4x512xf32> to vector<4x512xbf16>
    %c20 = arith.constant 20 : index
    %c0_18 = arith.constant 0 : index
    %34 = vector.load %arg10[%c20, %c0_18] : memref<144x512xbf16, #tpu.memory_space<vmem>>, vector<4x512xbf16>
    tpu.vector_store %arg10[%c20, %c0_18], %33 {strides = array<i32>} : memref<144x512xbf16, #tpu.memory_space<vmem>>, vector<4x512xbf16>,
    %35 = vector.extract_strided_slice %20 {offsets = [0, 22], sizes = [4, 512], strides = [1, 1]} : vector<4x554xf32> to vector<4x512xf32>
    %36 = arith.truncf %35 : vector<4x512xf32> to vector<4x512xbf16>
    %c24 = arith.constant 24 : index
    %c0_19 = arith.constant 0 : index
    %37 = vector.load %arg10[%c24, %c0_19] : memref<144x512xbf16, #tpu.memory_space<vmem>>, vector<4x512xbf16>
    tpu.vector_store %arg10[%c24, %c0_19], %36 {strides = array<i32>} : memref<144x512xbf16, #tpu.memory_space<vmem>>, vector<4x512xbf16>,
    %38 = vector.extract_strided_slice %20 {offsets = [0, 40], sizes = [4, 512], strides = [1, 1]} : vector<4x554xf32> to vector<4x512xf32>
    %39 = arith.truncf %38 : vector<4x512xf32> to vector<4x512xbf16>
    %c28 = arith.constant 28 : index
    %c0_20 = arith.constant 0 : index
    %40 = vector.load %arg10[%c28, %c0_20] : memref<144x512xbf16, #tpu.memory_space<vmem>>, vector<4x512xbf16>
    tpu.vector_store %arg10[%c28, %c0_20], %39 {strides = array<i32>} : memref<144x512xbf16, #tpu.memory_space<vmem>>, vector<4x512xbf16>,
    %41 = vector.extract_strided_slice %20 {offsets = [0, 41], sizes = [4, 512], strides = [1, 1]} : vector<4x554xf32> to vector<4x512xf32>
    %42 = arith.truncf %41 : vector<4x512xf32> to vector<4x512xbf16>
    %c32 = arith.constant 32 : index
    %c0_21 = arith.constant 0 : index
    %43 = vector.load %arg10[%c32, %c0_21] : memref<144x512xbf16, #tpu.memory_space<vmem>>, vector<4x512xbf16>
    tpu.vector_store %arg10[%c32, %c0_21], %42 {strides = array<i32>} : memref<144x512xbf16, #tpu.memory_space<vmem>>, vector<4x512xbf16>,
    %44 = vector.extract_strided_slice %20 {offsets = [0, 42], sizes = [4, 512], strides = [1, 1]} : vector<4x554xf32> to vector<4x512xf32>
    %45 = arith.truncf %44 : vector<4x512xf32> to vector<4x512xbf16>
    %c36 = arith.constant 36 : index
    %c0_22 = arith.constant 0 : index
    %46 = vector.load %arg10[%c36, %c0_22] : memref<144x512xbf16, #tpu.memory_space<vmem>>, vector<4x512xbf16>
    tpu.vector_store %arg10[%c36, %c0_22], %45 {strides = array<i32>} : memref<144x512xbf16, #tpu.memory_space<vmem>>, vector<4x512xbf16>,
    %cst_23 = arith.constant 0.000000e+00 : f32
    %47 = vector.broadcast %cst_23 : f32 to vector<4x42xf32>
    %48 = tpu.concatenate %47, %17, %47 in 1 : vector<4x42xf32>, vector<4x512xf32>, vector<4x42xf32> -> vector<4x596xf32>
    %49 = vector.extract_strided_slice %48 {offsets = [0, 0], sizes = [4, 512], strides = [1, 1]} : vector<4x596xf32> to vector<4x512xf32>
    %50 = arith.truncf %49 : vector<4x512xf32> to vector<4x512xbf16>
    %c40 = arith.constant 40 : index
    %c0_24 = arith.constant 0 : index
    %51 = vector.load %arg10[%c40, %c0_24] : memref<144x512xbf16, #tpu.memory_space<vmem>>, vector<4x512xbf16>
    tpu.vector_store %arg10[%c40, %c0_24], %50 {strides = array<i32>} : memref<144x512xbf16, #tpu.memory_space<vmem>>, vector<4x512xbf16>,
    %52 = vector.extract_strided_slice %48 {offsets = [0, 1], sizes = [4, 512], strides = [1, 1]} : vector<4x596xf32> to vector<4x512xf32>
    %53 = arith.truncf %52 : vector<4x512xf32> to vector<4x512xbf16>
    %c44 = arith.constant 44 : index
    %c0_25 = arith.constant 0 : index
    %54 = vector.load %arg10[%c44, %c0_25] : memref<144x512xbf16, #tpu.memory_space<vmem>>, vector<4x512xbf16>
    tpu.vector_store %arg10[%c44, %c0_25], %53 {strides = array<i32>} : memref<144x512xbf16, #tpu.memory_space<vmem>>, vector<4x512xbf16>,
    %55 = vector.extract_strided_slice %48 {offsets = [0, 2], sizes = [4, 512], strides = [1, 1]} : vector<4x596xf32> to vector<4x512xf32>
    %56 = arith.truncf %55 : vector<4x512xf32> to vector<4x512xbf16>
    %c48 = arith.constant 48 : index
    %c0_26 = arith.constant 0 : index
    %57 = vector.load %arg10[%c48, %c0_26] : memref<144x512xbf16, #tpu.memory_space<vmem>>, vector<4x512xbf16>
    tpu.vector_store %arg10[%c48, %c0_26], %56 {strides = array<i32>} : memref<144x512xbf16, #tpu.memory_space<vmem>>, vector<4x512xbf16>,
    %58 = vector.extract_strided_slice %48 {offsets = [0, 3], sizes = [4, 512], strides = [1, 1]} : vector<4x596xf32> to vector<4x512xf32>
    %59 = arith.truncf %58 : vector<4x512xf32> to vector<4x512xbf16>
    %c52 = arith.constant 52 : index
    %c0_27 = arith.constant 0 : index
    %60 = vector.load %arg10[%c52, %c0_27] : memref<144x512xbf16, #tpu.memory_space<vmem>>, vector<4x512xbf16>
    tpu.vector_store %arg10[%c52, %c0_27], %59 {strides = array<i32>} : memref<144x512xbf16, #tpu.memory_space<vmem>>, vector<4x512xbf16>,
    %61 = vector.extract_strided_slice %48 {offsets = [0, 4], sizes = [4, 512], strides = [1, 1]} : vector<4x596xf32> to vector<4x512xf32>
    %62 = arith.truncf %61 : vector<4x512xf32> to vector<4x512xbf16>
    %c56 = arith.constant 56 : index
    %c0_28 = arith.constant 0 : index
    %63 = vector.load %arg10[%c56, %c0_28] : memref<144x512xbf16, #tpu.memory_space<vmem>>, vector<4x512xbf16>
    tpu.vector_store %arg10[%c56, %c0_28], %62 {strides = array<i32>} : memref<144x512xbf16, #tpu.memory_space<vmem>>, vector<4x512xbf16>,
    %64 = vector.extract_strided_slice %48 {offsets = [0, 20], sizes = [4, 512], strides = [1, 1]} : vector<4x596xf32> to vector<4x512xf32>
    %65 = arith.truncf %64 : vector<4x512xf32> to vector<4x512xbf16>
    %c60 = arith.constant 60 : index
    %c0_29 = arith.constant 0 : index
    %66 = vector.load %arg10[%c60, %c0_29] : memref<144x512xbf16, #tpu.memory_space<vmem>>, vector<4x512xbf16>
    tpu.vector_store %arg10[%c60, %c0_29], %65 {strides = array<i32>} : memref<144x512xbf16, #tpu.memory_space<vmem>>, vector<4x512xbf16>,
    %67 = vector.extract_strided_slice %48 {offsets = [0, 21], sizes = [4, 512], strides = [1, 1]} : vector<4x596xf32> to vector<4x512xf32>
    %68 = arith.truncf %67 : vector<4x512xf32> to vector<4x512xbf16>
    %c64 = arith.constant 64 : index
    %c0_30 = arith.constant 0 : index
    %69 = vector.load %arg10[%c64, %c0_30] : memref<144x512xbf16, #tpu.memory_space<vmem>>, vector<4x512xbf16>
    tpu.vector_store %arg10[%c64, %c0_30], %68 {strides = array<i32>} : memref<144x512xbf16, #tpu.memory_space<vmem>>, vector<4x512xbf16>,
    %70 = vector.extract_strided_slice %48 {offsets = [0, 22], sizes = [4, 512], strides = [1, 1]} : vector<4x596xf32> to vector<4x512xf32>
    %71 = arith.truncf %70 : vector<4x512xf32> to vector<4x512xbf16>
    %c68 = arith.constant 68 : index
    %c0_31 = arith.constant 0 : index
    %72 = vector.load %arg10[%c68, %c0_31] : memref<144x512xbf16, #tpu.memory_space<vmem>>, vector<4x512xbf16>
    tpu.vector_store %arg10[%c68, %c0_31], %71 {strides = array<i32>} : memref<144x512xbf16, #tpu.memory_space<vmem>>, vector<4x512xbf16>,
    %73 = vector.extract_strided_slice %48 {offsets = [0, 23], sizes = [4, 512], strides = [1, 1]} : vector<4x596xf32> to vector<4x512xf32>
    %74 = arith.truncf %73 : vector<4x512xf32> to vector<4x512xbf16>
    %c72 = arith.constant 72 : index
    %c0_32 = arith.constant 0 : index
    %75 = vector.load %arg10[%c72, %c0_32] : memref<144x512xbf16, #tpu.memory_space<vmem>>, vector<4x512xbf16>
    tpu.vector_store %arg10[%c72, %c0_32], %74 {strides = array<i32>} : memref<144x512xbf16, #tpu.memory_space<vmem>>, vector<4x512xbf16>,
    %76 = vector.extract_strided_slice %48 {offsets = [0, 24], sizes = [4, 512], strides = [1, 1]} : vector<4x596xf32> to vector<4x512xf32>
    %77 = arith.truncf %76 : vector<4x512xf32> to vector<4x512xbf16>
    %c76 = arith.constant 76 : index
    %c0_33 = arith.constant 0 : index
    %78 = vector.load %arg10[%c76, %c0_33] : memref<144x512xbf16, #tpu.memory_space<vmem>>, vector<4x512xbf16>
    tpu.vector_store %arg10[%c76, %c0_33], %77 {strides = array<i32>} : memref<144x512xbf16, #tpu.memory_space<vmem>>, vector<4x512xbf16>,
    %79 = vector.extract_strided_slice %48 {offsets = [0, 40], sizes = [4, 512], strides = [1, 1]} : vector<4x596xf32> to vector<4x512xf32>
    %80 = arith.truncf %79 : vector<4x512xf32> to vector<4x512xbf16>
    %c80 = arith.constant 80 : index
    %c0_34 = arith.constant 0 : index
    %81 = vector.load %arg10[%c80, %c0_34] : memref<144x512xbf16, #tpu.memory_space<vmem>>, vector<4x512xbf16>
    tpu.vector_store %arg10[%c80, %c0_34], %80 {strides = array<i32>} : memref<144x512xbf16, #tpu.memory_space<vmem>>, vector<4x512xbf16>,
    %82 = vector.extract_strided_slice %48 {offsets = [0, 41], sizes = [4, 512], strides = [1, 1]} : vector<4x596xf32> to vector<4x512xf32>
    %83 = arith.truncf %82 : vector<4x512xf32> to vector<4x512xbf16>
    %c84 = arith.constant 84 : index
    %c0_35 = arith.constant 0 : index
    %84 = vector.load %arg10[%c84, %c0_35] : memref<144x512xbf16, #tpu.memory_space<vmem>>, vector<4x512xbf16>
    tpu.vector_store %arg10[%c84, %c0_35], %83 {strides = array<i32>} : memref<144x512xbf16, #tpu.memory_space<vmem>>, vector<4x512xbf16>,
    %85 = arith.truncf %17 : vector<4x512xf32> to vector<4x512xbf16>
    %c88 = arith.constant 88 : index
    %c0_36 = arith.constant 0 : index
    %86 = vector.load %arg10[%c88, %c0_36] : memref<144x512xbf16, #tpu.memory_space<vmem>>, vector<4x512xbf16>
    tpu.vector_store %arg10[%c88, %c0_36], %85 {strides = array<i32>} : memref<144x512xbf16, #tpu.memory_space<vmem>>, vector<4x512xbf16>,
    %87 = vector.extract_strided_slice %48 {offsets = [0, 43], sizes = [4, 512], strides = [1, 1]} : vector<4x596xf32> to vector<4x512xf32>
    %88 = arith.truncf %87 : vector<4x512xf32> to vector<4x512xbf16>
    %c92 = arith.constant 92 : index
    %c0_37 = arith.constant 0 : index
    %89 = vector.load %arg10[%c92, %c0_37] : memref<144x512xbf16, #tpu.memory_space<vmem>>, vector<4x512xbf16>
    tpu.vector_store %arg10[%c92, %c0_37], %88 {strides = array<i32>} : memref<144x512xbf16, #tpu.memory_space<vmem>>, vector<4x512xbf16>,
    %90 = vector.extract_strided_slice %48 {offsets = [0, 44], sizes = [4, 512], strides = [1, 1]} : vector<4x596xf32> to vector<4x512xf32>
    %91 = arith.truncf %90 : vector<4x512xf32> to vector<4x512xbf16>
    %c96 = arith.constant 96 : index
    %c0_38 = arith.constant 0 : index
    %92 = vector.load %arg10[%c96, %c0_38] : memref<144x512xbf16, #tpu.memory_space<vmem>>, vector<4x512xbf16>
    tpu.vector_store %arg10[%c96, %c0_38], %91 {strides = array<i32>} : memref<144x512xbf16, #tpu.memory_space<vmem>>, vector<4x512xbf16>,
    %93 = vector.extract_strided_slice %48 {offsets = [0, 60], sizes = [4, 512], strides = [1, 1]} : vector<4x596xf32> to vector<4x512xf32>
    %94 = arith.truncf %93 : vector<4x512xf32> to vector<4x512xbf16>
    %c100 = arith.constant 100 : index
    %c0_39 = arith.constant 0 : index
    %95 = vector.load %arg10[%c100, %c0_39] : memref<144x512xbf16, #tpu.memory_space<vmem>>, vector<4x512xbf16>
    tpu.vector_store %arg10[%c100, %c0_39], %94 {strides = array<i32>} : memref<144x512xbf16, #tpu.memory_space<vmem>>, vector<4x512xbf16>,
    %96 = vector.extract_strided_slice %48 {offsets = [0, 61], sizes = [4, 512], strides = [1, 1]} : vector<4x596xf32> to vector<4x512xf32>
    %97 = arith.truncf %96 : vector<4x512xf32> to vector<4x512xbf16>
    %c104 = arith.constant 104 : index
    %c0_40 = arith.constant 0 : index
    %98 = vector.load %arg10[%c104, %c0_40] : memref<144x512xbf16, #tpu.memory_space<vmem>>, vector<4x512xbf16>
    tpu.vector_store %arg10[%c104, %c0_40], %97 {strides = array<i32>} : memref<144x512xbf16, #tpu.memory_space<vmem>>, vector<4x512xbf16>,
    %99 = vector.extract_strided_slice %48 {offsets = [0, 62], sizes = [4, 512], strides = [1, 1]} : vector<4x596xf32> to vector<4x512xf32>
    %100 = arith.truncf %99 : vector<4x512xf32> to vector<4x512xbf16>
    %c108 = arith.constant 108 : index
    %c0_41 = arith.constant 0 : index
    %101 = vector.load %arg10[%c108, %c0_41] : memref<144x512xbf16, #tpu.memory_space<vmem>>, vector<4x512xbf16>
    tpu.vector_store %arg10[%c108, %c0_41], %100 {strides = array<i32>} : memref<144x512xbf16, #tpu.memory_space<vmem>>, vector<4x512xbf16>,
    %102 = vector.extract_strided_slice %48 {offsets = [0, 63], sizes = [4, 512], strides = [1, 1]} : vector<4x596xf32> to vector<4x512xf32>
    %103 = arith.truncf %102 : vector<4x512xf32> to vector<4x512xbf16>
    %c112 = arith.constant 112 : index
    %c0_42 = arith.constant 0 : index
    %104 = vector.load %arg10[%c112, %c0_42] : memref<144x512xbf16, #tpu.memory_space<vmem>>, vector<4x512xbf16>
    tpu.vector_store %arg10[%c112, %c0_42], %103 {strides = array<i32>} : memref<144x512xbf16, #tpu.memory_space<vmem>>, vector<4x512xbf16>,
    %105 = vector.extract_strided_slice %48 {offsets = [0, 64], sizes = [4, 512], strides = [1, 1]} : vector<4x596xf32> to vector<4x512xf32>
    %106 = arith.truncf %105 : vector<4x512xf32> to vector<4x512xbf16>
    %c116 = arith.constant 116 : index
    %c0_43 = arith.constant 0 : index
    %107 = vector.load %arg10[%c116, %c0_43] : memref<144x512xbf16, #tpu.memory_space<vmem>>, vector<4x512xbf16>
    tpu.vector_store %arg10[%c116, %c0_43], %106 {strides = array<i32>} : memref<144x512xbf16, #tpu.memory_space<vmem>>, vector<4x512xbf16>,
    %108 = vector.extract_strided_slice %48 {offsets = [0, 80], sizes = [4, 512], strides = [1, 1]} : vector<4x596xf32> to vector<4x512xf32>
    %109 = arith.truncf %108 : vector<4x512xf32> to vector<4x512xbf16>
    %c120 = arith.constant 120 : index
    %c0_44 = arith.constant 0 : index
    %110 = vector.load %arg10[%c120, %c0_44] : memref<144x512xbf16, #tpu.memory_space<vmem>>, vector<4x512xbf16>
    tpu.vector_store %arg10[%c120, %c0_44], %109 {strides = array<i32>} : memref<144x512xbf16, #tpu.memory_space<vmem>>, vector<4x512xbf16>,
    %111 = vector.extract_strided_slice %48 {offsets = [0, 81], sizes = [4, 512], strides = [1, 1]} : vector<4x596xf32> to vector<4x512xf32>
    %112 = arith.truncf %111 : vector<4x512xf32> to vector<4x512xbf16>
    %c124 = arith.constant 124 : index
    %c0_45 = arith.constant 0 : index
    %113 = vector.load %arg10[%c124, %c0_45] : memref<144x512xbf16, #tpu.memory_space<vmem>>, vector<4x512xbf16>
    tpu.vector_store %arg10[%c124, %c0_45], %112 {strides = array<i32>} : memref<144x512xbf16, #tpu.memory_space<vmem>>, vector<4x512xbf16>,
    %114 = vector.extract_strided_slice %48 {offsets = [0, 82], sizes = [4, 512], strides = [1, 1]} : vector<4x596xf32> to vector<4x512xf32>
    %115 = arith.truncf %114 : vector<4x512xf32> to vector<4x512xbf16>
    %c128 = arith.constant 128 : index
    %c0_46 = arith.constant 0 : index
    %116 = vector.load %arg10[%c128, %c0_46] : memref<144x512xbf16, #tpu.memory_space<vmem>>, vector<4x512xbf16>
    tpu.vector_store %arg10[%c128, %c0_46], %115 {strides = array<i32>} : memref<144x512xbf16, #tpu.memory_space<vmem>>, vector<4x512xbf16>,
    %117 = vector.extract_strided_slice %48 {offsets = [0, 83], sizes = [4, 512], strides = [1, 1]} : vector<4x596xf32> to vector<4x512xf32>
    %118 = arith.truncf %117 : vector<4x512xf32> to vector<4x512xbf16>
    %c132 = arith.constant 132 : index
    %c0_47 = arith.constant 0 : index
    %119 = vector.load %arg10[%c132, %c0_47] : memref<144x512xbf16, #tpu.memory_space<vmem>>, vector<4x512xbf16>
    tpu.vector_store %arg10[%c132, %c0_47], %118 {strides = array<i32>} : memref<144x512xbf16, #tpu.memory_space<vmem>>, vector<4x512xbf16>,
    %120 = vector.extract_strided_slice %48 {offsets = [0, 84], sizes = [4, 512], strides = [1, 1]} : vector<4x596xf32> to vector<4x512xf32>
    %121 = arith.truncf %120 : vector<4x512xf32> to vector<4x512xbf16>
    %c136 = arith.constant 136 : index
    %c0_48 = arith.constant 0 : index
    %122 = vector.load %arg10[%c136, %c0_48] : memref<144x512xbf16, #tpu.memory_space<vmem>>, vector<4x512xbf16>
    tpu.vector_store %arg10[%c136, %c0_48], %121 {strides = array<i32>} : memref<144x512xbf16, #tpu.memory_space<vmem>>, vector<4x512xbf16>,
    %cst_49 = arith.constant 0.000000e+00 : f32
    %123 = vector.broadcast %cst_49 : f32 to vector<1x512xf32>
    %124 = arith.cmpf ogt, %3, %123 : vector<1x512xf32>
    %cst_50 = arith.constant -1.000000e+30 : f32
    %125 = vector.shape_cast %124 : vector<1x512xi1> to vector<1x512xi1>
    %126 = vector.broadcast %125 : vector<1x512xi1> to vector<4x512xi1>
    %127 = vector.broadcast %cst_50 : f32 to vector<4x512xf32>
    %128 = arith.select %126, %2, %127 : vector<4x512xi1>, vector<4x512xf32>
    %cst_51 = arith.constant 0.000000e+00 : f32
    %129 = vector.broadcast %cst_51 : f32 to vector<4x2xf32>
    %130 = tpu.concatenate %129, %128, %129 in 1 : vector<4x2xf32>, vector<4x512xf32>, vector<4x2xf32> -> vector<4x516xf32>
    %131 = vector.extract_strided_slice %130 {offsets = [0, 1], sizes = [4, 512], strides = [1, 1]} : vector<4x516xf32> to vector<4x512xf32>
    %132 = arith.maximumf %131, %128 : vector<4x512xf32>
    %133 = vector.extract_strided_slice %130 {offsets = [0, 3], sizes = [4, 512], strides = [1, 1]} : vector<4x516xf32> to vector<4x512xf32>
    %134 = arith.maximumf %132, %133 : vector<4x512xf32>
    %cst_52 = arith.constant 0.000000e+00 : f32
    %135 = vector.broadcast %cst_52 : f32 to vector<4x20xf32>
    %136 = tpu.concatenate %135, %134, %135 in 1 : vector<4x20xf32>, vector<4x512xf32>, vector<4x20xf32> -> vector<4x552xf32>
    %137 = vector.extract_strided_slice %136 {offsets = [0, 0], sizes = [4, 512], strides = [1, 1]} : vector<4x552xf32> to vector<4x512xf32>
    %138 = arith.maximumf %137, %134 : vector<4x512xf32>
    %139 = vector.extract_strided_slice %136 {offsets = [0, 40], sizes = [4, 512], strides = [1, 1]} : vector<4x552xf32> to vector<4x512xf32>
    %140 = arith.maximumf %138, %139 : vector<4x512xf32>
    %cst_53 = arith.constant 0.000000e+00 : f32
    %141 = vector.broadcast %cst_53 : f32 to vector<1x512xf32>
    %142 = arith.cmpf ogt, %3, %141 : vector<1x512xf32>
    %cst_54 = arith.constant 0.000000e+00 : f32
    %143 = vector.shape_cast %142 : vector<1x512xi1> to vector<1x512xi1>
    %144 = vector.broadcast %143 : vector<1x512xi1> to vector<4x512xi1>
    %145 = vector.broadcast %cst_54 : f32 to vector<4x512xf32>
    %146 = arith.select %144, %140, %145 : vector<4x512xi1>, vector<4x512xf32>
    %147 = arith.truncf %146 : vector<4x512xf32> to vector<4x512xbf16>
    %c140 = arith.constant 140 : index
    %c0_55 = arith.constant 0 : index
    %148 = vector.load %arg10[%c140, %c0_55] : memref<144x512xbf16, #tpu.memory_space<vmem>>, vector<4x512xbf16>
    tpu.vector_store %arg10[%c140, %c0_55], %147 {strides = array<i32>} : memref<144x512xbf16, #tpu.memory_space<vmem>>, vector<4x512xbf16>,
    %c0_56 = arith.constant 0 : index
    %c0_57 = arith.constant 0 : index
    %149 = vector.load %arg6[%c0_56, %c0_57] : memref<24x144xbf16, #tpu.memory_space<vmem>>, vector<24x144xbf16>
    %c0_58 = arith.constant 0 : index
    %c0_59 = arith.constant 0 : index
    %150 = vector.load %arg10[%c0_58, %c0_59] : memref<144x512xbf16, #tpu.memory_space<vmem>>, vector<144x512xbf16>
    %cst_60 = arith.constant dense<0.000000e+00> : vector<24x512xf32>
    %151 = tpu.matmul %149, %150, %cst_60 {dimension_numbers = #tpu.dot_dimension_numbers<[1], [0], [0], [1], [0, 0, 1, 1], [], []>} : vector<24x144xbf16>, vector<144x512xbf16>, vector<24x512xf32> -> vector<24x512xf32>
    %c0_61 = arith.constant 0 : index
    %c0_62 = arith.constant 0 : index
    %152 = vector.load %arg7[%c0_61, %c0_62] : memref<24x1xf32, #tpu.memory_space<vmem>>, vector<24x1xf32>
    %153 = vector.broadcast %152 : vector<24x1xf32> to vector<24x512xf32>
    %154 = arith.mulf %151, %153 : vector<24x512xf32>
    %c0_63 = arith.constant 0 : index
    %c0_64 = arith.constant 0 : index
    %155 = vector.load %arg8[%c0_63, %c0_64] : memref<24x1xf32, #tpu.memory_space<vmem>>, vector<24x1xf32>
    %156 = vector.broadcast %155 : vector<24x1xf32> to vector<24x512xf32>
    %157 = arith.addf %154, %156 : vector<24x512xf32>
    %cst_65 = arith.constant 0.000000e+00 : f32
    %158 = vector.broadcast %cst_65 : f32 to vector<24x512xf32>
    %159 = arith.maximumf %157, %158 : vector<24x512xf32>
    %c0_66 = arith.constant 0 : index
    %c0_67 = arith.constant 0 : index
    %c0_68 = arith.constant 0 : index
    %160 = vector.load %arg9[%c0_66, %c0_67, %c0_68] : memref<1x24x512xf32, #tpu.memory_space<vmem>>, vector<1x24x512xf32>
    %161 = vector.shape_cast %160 : vector<1x24x512xf32> to vector<24x512xf32>
    %162 = vector.shape_cast %159 : vector<24x512xf32> to vector<1x24x512xf32>
    tpu.vector_store %arg9[%c0_66, %c0_67, %c0_68], %162 {strides = array<i32>} : memref<1x24x512xf32, #tpu.memory_space<vmem>>, vector<1x24x512xf32>,
    return
  }
  func.func @transform_0(%arg0: i32) -> (i32, i32, i32) {
    %c0_i32 = arith.constant 0 : i32
    %c0_i32_0 = arith.constant 0 : i32
    %c0_i32_1 = arith.constant 0 : i32
    return %arg0, %c0_i32, %c0_i32_0 : i32, i32, i32
  }
  func.func @transform_1(%arg0: i32) -> (i32, i32) {
    %c0_i32 = arith.constant 0 : i32
    %c0_i32_0 = arith.constant 0 : i32
    %c0_i32_1 = arith.constant 0 : i32
    return %c0_i32, %c0_i32_0 : i32, i32
  }
  func.func @transform_2(%arg0: i32) -> (i32, i32) {
    %c0_i32 = arith.constant 0 : i32
    %c0_i32_0 = arith.constant 0 : i32
    %c0_i32_1 = arith.constant 0 : i32
    return %c0_i32, %c0_i32_0 : i32, i32
  }
  func.func @transform_3(%arg0: i32) -> (i32, i32) {
    %c0_i32 = arith.constant 0 : i32
    %c0_i32_0 = arith.constant 0 : i32
    %c0_i32_1 = arith.constant 0 : i32
    return %c0_i32, %c0_i32_0 : i32, i32
  }
  func.func @transform_4(%arg0: i32) -> (i32, i32) {
    %c0_i32 = arith.constant 0 : i32
    %c0_i32_0 = arith.constant 0 : i32
    %c0_i32_1 = arith.constant 0 : i32
    return %c0_i32, %c0_i32_0 : i32, i32
  }
  func.func @transform_5(%arg0: i32) -> (i32, i32) {
    %c0_i32 = arith.constant 0 : i32
    %c0_i32_0 = arith.constant 0 : i32
    %c0_i32_1 = arith.constant 0 : i32
    return %c0_i32, %c0_i32_0 : i32, i32
  }
  func.func @transform_6(%arg0: i32) -> (i32, i32) {
    %c0_i32 = arith.constant 0 : i32
    %c0_i32_0 = arith.constant 0 : i32
    %c0_i32_1 = arith.constant 0 : i32
    return %c0_i32, %c0_i32_0 : i32, i32
  }
  func.func @transform_7(%arg0: i32) -> (i32, i32) {
    %c0_i32 = arith.constant 0 : i32
    %c0_i32_0 = arith.constant 0 : i32
    %c0_i32_1 = arith.constant 0 : i32
    return %c0_i32, %c0_i32_0 : i32, i32
  }
  func.func @transform_8(%arg0: i32) -> (i32, i32, i32) {
    %c0_i32 = arith.constant 0 : i32
    %c0_i32_0 = arith.constant 0 : i32
    %c0_i32_1 = arith.constant 0 : i32
    return %arg0, %c0_i32, %c0_i32_0 : i32, i32, i32
  }
}

</mosaic_0001>

<llo_original>
// kernel: tpu_custom_call.1
$region0: #{tpu_custom_call.1}
  #allocation0 [shape = 'u32[]', space=smem, size = 0x4, offset = 0x4, fixed_abs, tag = 'smem constant byte address 0x4 - core index']
  #allocation1 [shape = 'u32[144,128]{1,0:T(1,128)}', space=vmem, size = 0x12000, scoped, tag = 'internal scratch']
  #allocation2 [shape = 'bf16[144,512]{1,0:T(16,128)(2,1)}', space=vmem, size = 0x24000, scoped, tag = 'scratch operand']
  %s0 = inlined_call_operand.vmem [shape: bf16[2,4,512], index: 0, kind: input, shape index: {}]
  %s1 = inlined_call_operand.vmem [shape: f32[1,512], index: 1, kind: input, shape index: {}]
  %s2 = inlined_call_operand.vmem [shape: bf16[8,4], index: 2, kind: input, shape index: {}]
  %s3 = inlined_call_operand.vmem [shape: f32[8,1], index: 3, kind: input, shape index: {}]
  %s4 = inlined_call_operand.vmem [shape: f32[8,1], index: 4, kind: input, shape index: {}]
  %s5 = inlined_call_operand.vmem [shape: bf16[24,144], index: 5, kind: input, shape index: {}]
  %s6 = inlined_call_operand.vmem [shape: f32[24,1], index: 6, kind: input, shape index: {}]
  %s7 = inlined_call_operand.vmem [shape: f32[24,1], index: 7, kind: input, shape index: {}]
  %s8 = inlined_call_operand.hbm [shape: f32[2,24,512], index: 8, kind: output, shape index: {}]
  %s9 = sld [smem:[#allocation0]]
  $region65: #{tpu_custom_call.1} parent=0
    _
  %s11 = ssub.s32 1, %s9
  %s12 = scalar_select 0, %s11, %s9
  $region1: #{tpu_custom_call.1} parent=0
    #allocation3 [shape = 'u8[98304]{0}', space=vmem, size = 0x18000, scoped, tag = 'output window, operand 0']
    #allocation4 [shape = 's32[2]{0}', space=sflag, size = 0x8, scoped, tag = 'scoped memory for tpu_custom_call.1']
    %13 = vsyncpa [#allocation4], 0
    %s14 = scalar_lea.sflag [#allocation4], 1
    %15 = vsyncpa %s14, 0
    loop: start=0, step=1, limit=4
    $region2: #{tpu_custom_call.1} parent=1 // loop_pre_header
      _
    $region3: #{tpu_custom_call.1} parent=1 // loop_header
      %s17 = sphi 0, %s21
      %p18 = scmp.ge.s32.totalorder %s17, 4
      %s27 = sphi 0, %s29
      %s30 = sphi 0, %s27
      %s31 = sphi 0, %s30
      %s47 = sphi 0, %s31
      %s51 = sphi 0, %s51
      %s53 = sphi 0, %s51
      %s54 = sphi 0, %s53
      %s68 = sphi 0, %s54
      %s72 = sphi 0, %s72
      %s74 = sphi 0, %s72
      %s75 = sphi 0, %s74
      %s89 = sphi 0, %s75
      %s93 = sphi 0, %s93
      %s95 = sphi 0, %s93
      %s96 = sphi 0, %s95
      %s110 = sphi 0, %s96
      %s114 = sphi 0, %s114
      %s116 = sphi 0, %s114
      %s117 = sphi 0, %s116
      %s131 = sphi 0, %s117
      %s135 = sphi 0, %s135
      %s137 = sphi 0, %s135
      %s138 = sphi 0, %s137
      %s152 = sphi 0, %s138
      %s156 = sphi 0, %s156
      %s158 = sphi 0, %s156
      %s159 = sphi 0, %s158
      %s173 = sphi 0, %s159
      %s177 = sphi 0, %s177
      %s179 = sphi 0, %s177
      %s180 = sphi 0, %s179
      %s194 = sphi 0, %s180
      %s200 = sphi 0, %s202
      %s203 = sphi 0, %s200
      %s204 = sphi 0, %s203
      %s220 = sphi 0, %s204
    $region4: #{tpu_custom_call.1} parent=1 // loop_header_branch
      %20 = sbr.rel (%p18) target = $region8
    $region5: #{tpu_custom_call.1} parent=1 // loop_body
      %s22 = ssub.s32 %s17, 1
      %s23 = ssub.s32 %s17, 2
      %s24 = sadd.s32 %s17, 1
      %s25 = ssub.s32 %s17, %s24
      %p26 = scmp.eq.s32.totalorder %s25, 0
      %s28 = sadd.s32 %s27, 1
      %s29 = scalar_select %p26, %s27, %s28
      %p32 = pneg %p26
      %p33 = scmp.eq.s32.totalorder %s17, 1
      %p34 = por %p32, %p33
      %p35 = scmp.ne.s32.totalorder %s27, %s30
      %p36 = scmp.eq.s32.totalorder %s17, 0
      %p37 = por %p35, %p36
      %p38 = scmp.ne.s32.totalorder %s27, %s30
      %p39 = scmp.eq.s32.totalorder %s22, 1
      %p40 = por %p38, %p39
      %p41 = scmp.ne.s32.totalorder %s30, %s31
      %p42 = scmp.eq.s32.totalorder %s22, 0
      %p43 = por %p41, %p42
      %p44 = scmp.ne.s32.totalorder %s30, %s31
      %p45 = scmp.eq.s32.totalorder %s23, 1
      %p46 = por %p44, %p45
      %p48 = scmp.ne.s32.totalorder %s31, %s47
      %p49 = scmp.eq.s32.totalorder %s23, 0
      %p50 = por %p48, %p49
      %s52 = sadd.s32 %s51, 1
      %p55 = scmp.eq.s32.totalorder %s17, 1
      %p56 = scmp.ne.s32.totalorder %s51, %s53
      %p57 = scmp.eq.s32.totalorder %s17, 0
      %p58 = por %p56, %p57
      %p59 = scmp.ne.s32.totalorder %s51, %s53
      %p60 = scmp.eq.s32.totalorder %s22, 1
      %p61 = por %p59, %p60
      %p62 = scmp.ne.s32.totalorder %s53, %s54
      %p63 = scmp.eq.s32.totalorder %s22, 0
      %p64 = por %p62, %p63
      %p65 = scmp.ne.s32.totalorder %s53, %s54
      %p66 = scmp.eq.s32.totalorder %s23, 1
      %p67 = por %p65, %p66
      %p69 = scmp.ne.s32.totalorder %s54, %s68
      %p70 = scmp.eq.s32.totalorder %s23, 0
      %p71 = por %p69, %p70
      %s73 = sadd.s32 %s72, 1
      %p76 = scmp.eq.s32.totalorder %s17, 1
      %p77 = scmp.ne.s32.totalorder %s72, %s74
      %p78 = scmp.eq.s32.totalorder %s17, 0
      %p79 = por %p77, %p78
      %p80 = scmp.ne.s32.totalorder %s72, %s74
      %p81 = scmp.eq.s32.totalorder %s22, 1
      %p82 = por %p80, %p81
      %p83 = scmp.ne.s32.totalorder %s74, %s75
      %p84 = scmp.eq.s32.totalorder %s22, 0
      %p85 = por %p83, %p84
      %p86 = scmp.ne.s32.totalorder %s74, %s75
      %p87 = scmp.eq.s32.totalorder %s23, 1
      %p88 = por %p86, %p87
      %p90 = scmp.ne.s32.totalorder %s75, %s89
      %p91 = scmp.eq.s32.totalorder %s23, 0
      %p92 = por %p90, %p91
      %s94 = sadd.s32 %s93, 1
      %p97 = scmp.eq.s32.totalorder %s17, 1
      %p98 = scmp.ne.s32.totalorder %s93, %s95
      %p99 = scmp.eq.s32.totalorder %s17, 0
      %p100 = por %p98, %p99
      %p101 = scmp.ne.s32.totalorder %s93, %s95
      %p102 = scmp.eq.s32.totalorder %s22, 1
      %p103 = por %p101, %p102
      %p104 = scmp.ne.s32.totalorder %s95, %s96
      %p105 = scmp.eq.s32.totalorder %s22, 0
      %p106 = por %p104, %p105
      %p107 = scmp.ne.s32.totalorder %s95, %s96
      %p108 = scmp.eq.s32.totalorder %s23, 1
      %p109 = por %p107, %p108
      %p111 = scmp.ne.s32.totalorder %s96, %s110
      %p112 = scmp.eq.s32.totalorder %s23, 0
      %p113 = por %p111, %p112
      %s115 = sadd.s32 %s114, 1
      %p118 = scmp.eq.s32.totalorder %s17, 1
      %p119 = scmp.ne.s32.totalorder %s114, %s116
      %p120 = scmp.eq.s32.totalorder %s17, 0
      %p121 = por %p119, %p120
      %p122 = scmp.ne.s32.totalorder %s114, %s116
      %p123 = scmp.eq.s32.totalorder %s22, 1
      %p124 = por %p122, %p123
      %p125 = scmp.ne.s32.totalorder %s116, %s117
      %p126 = scmp.eq.s32.totalorder %s22, 0
      %p127 = por %p125, %p126
      %p128 = scmp.ne.s32.totalorder %s116, %s117
      %p129 = scmp.eq.s32.totalorder %s23, 1
      %p130 = por %p128, %p129
      %p132 = scmp.ne.s32.totalorder %s117, %s131
      %p133 = scmp.eq.s32.totalorder %s23, 0
      %p134 = por %p132, %p133
      %s136 = sadd.s32 %s135, 1
      %p139 = scmp.eq.s32.totalorder %s17, 1
      %p140 = scmp.ne.s32.totalorder %s135, %s137
      %p141 = scmp.eq.s32.totalorder %s17, 0
      %p142 = por %p140, %p141
      %p143 = scmp.ne.s32.totalorder %s135, %s137
      %p144 = scmp.eq.s32.totalorder %s22, 1
      %p145 = por %p143, %p144
      %p146 = scmp.ne.s32.totalorder %s137, %s138
      %p147 = scmp.eq.s32.totalorder %s22, 0
      %p148 = por %p146, %p147
      %p149 = scmp.ne.s32.totalorder %s137, %s138
      %p150 = scmp.eq.s32.totalorder %s23, 1
      %p151 = por %p149, %p150
      %p153 = scmp.ne.s32.totalorder %s138, %s152
      %p154 = scmp.eq.s32.totalorder %s23, 0
      %p155 = por %p153, %p154
      %s157 = sadd.s32 %s156, 1
      %p160 = scmp.eq.s32.totalorder %s17, 1
      %p161 = scmp.ne.s32.totalorder %s156, %s158
      %p162 = scmp.eq.s32.totalorder %s17, 0
      %p163 = por %p161, %p162
      %p164 = scmp.ne.s32.totalorder %s156, %s158
      %p165 = scmp.eq.s32.totalorder %s22, 1
      %p166 = por %p164, %p165
      %p167 = scmp.ne.s32.totalorder %s158, %s159
      %p168 = scmp.eq.s32.totalorder %s22, 0
      %p169 = por %p167, %p168
      %p170 = scmp.ne.s32.totalorder %s158, %s159
      %p171 = scmp.eq.s32.totalorder %s23, 1
      %p172 = por %p170, %p171
      %p174 = scmp.ne.s32.totalorder %s159, %s173
      %p175 = scmp.eq.s32.totalorder %s23, 0
      %p176 = por %p174, %p175
      %s178 = sadd.s32 %s177, 1
      %p181 = scmp.eq.s32.totalorder %s17, 1
      %p182 = scmp.ne.s32.totalorder %s177, %s179
      %p183 = scmp.eq.s32.totalorder %s17, 0
      %p184 = por %p182, %p183
      %p185 = scmp.ne.s32.totalorder %s177, %s179
      %p186 = scmp.eq.s32.totalorder %s22, 1
      %p187 = por %p185, %p186
      %p188 = scmp.ne.s32.totalorder %s179, %s180
      %p189 = scmp.eq.s32.totalorder %s22, 0
      %p190 = por %p188, %p189
      %p191 = scmp.ne.s32.totalorder %s179, %s180
      %p192 = scmp.eq.s32.totalorder %s23, 1
      %p193 = por %p191, %p192
      %p195 = scmp.ne.s32.totalorder %s180, %s194
      %p196 = scmp.eq.s32.totalorder %s23, 0
      %p197 = por %p195, %p196
      %s198 = ssub.s32 %s17, %s24
      %p199 = scmp.eq.s32.totalorder %s198, 0
      %s201 = sadd.s32 %s200, 1
      %s202 = scalar_select %p199, %s200, %s201
      %p205 = pneg %p199
      %p206 = scmp.eq.s32.totalorder %s17, 1
      %p207 = por %p205, %p206
      %p208 = scmp.ne.s32.totalorder %s200, %s203
      %p209 = scmp.eq.s32.totalorder %s17, 0
      %p210 = por %p208, %p209
      %p211 = scmp.ne.s32.totalorder %s200, %s203
      %p212 = scmp.eq.s32.totalorder %s22, 1
      %p213 = por %p211, %p212
      %p214 = scmp.ne.s32.totalorder %s203, %s204
      %p215 = scmp.eq.s32.totalorder %s22, 0
      %p216 = por %p214, %p215
      %p217 = scmp.ne.s32.totalorder %s203, %s204
      %p218 = scmp.eq.s32.totalorder %s23, 1
      %p219 = por %p217, %p218
      %p221 = scmp.ne.s32.totalorder %s204, %s220
      %p222 = scmp.eq.s32.totalorder %s23, 0
      %p223 = por %p221, %p222
      %p224 = scmp.le.s32.totalorder 1, %s17
      %p225 = scmp.lt.s32.totalorder %s17, 3
      %p226 = pnand %p224, %p225
      %p227 = pneg %p226
      // Predicated region
      $region9: #{tpu_custom_call.1} parent=5 // pred_check
        _
      $region10: #{tpu_custom_call.1} parent=5 // pred_check_branch
        %229 = sbr.rel (%p226) target = $region12
      $region11: #{tpu_custom_call.1} parent=5 // pred_region
        %s230 = ssub.s32 %s17, 1
        // Predicated region
        $region13: #{tpu_custom_call.1} parent=11 // pred_check
          %p231 = pneg %p64
        $region14: #{tpu_custom_call.1} parent=11 // pred_check_branch
          %233 = sbr.rel (%p231) target = $region16
        $region15: #{tpu_custom_call.1} parent=11 // pred_region
          _
        $region16: #{tpu_custom_call.1} parent=11 // pred_fallthru
          _
        // Predicated region
        $region17: #{tpu_custom_call.1} parent=11 // pred_check
          %p234 = pneg %p85
        $region18: #{tpu_custom_call.1} parent=11 // pred_check_branch
          %236 = sbr.rel (%p234) target = $region20
        $region19: #{tpu_custom_call.1} parent=11 // pred_region
          _
        $region20: #{tpu_custom_call.1} parent=11 // pred_fallthru
          _
        // Predicated region
        $region21: #{tpu_custom_call.1} parent=11 // pred_check
          %p237 = pneg %p106
        $region22: #{tpu_custom_call.1} parent=11 // pred_check_branch
          %239 = sbr.rel (%p237) target = $region24
        $region23: #{tpu_custom_call.1} parent=11 // pred_region
          _
        $region24: #{tpu_custom_call.1} parent=11 // pred_fallthru
          _
        // Predicated region
        $region25: #{tpu_custom_call.1} parent=11 // pred_check
          %p240 = pneg %p127
        $region26: #{tpu_custom_call.1} parent=11 // pred_check_branch
          %242 = sbr.rel (%p240) target = $region28
        $region27: #{tpu_custom_call.1} parent=11 // pred_region
          _
        $region28: #{tpu_custom_call.1} parent=11 // pred_fallthru
          _
        // Predicated region
        $region29: #{tpu_custom_call.1} parent=11 // pred_check
          %p243 = pneg %p148
        $region30: #{tpu_custom_call.1} parent=11 // pred_check_branch
          %245 = sbr.rel (%p243) target = $region32
        $region31: #{tpu_custom_call.1} parent=11 // pred_region
          _
        $region32: #{tpu_custom_call.1} parent=11 // pred_fallthru
          _
        // Predicated region
        $region33: #{tpu_custom_call.1} parent=11 // pred_check
          %p246 = pneg %p169
        $region34: #{tpu_custom_call.1} parent=11 // pred_check_branch
          %248 = sbr.rel (%p246) target = $region36
        $region35: #{tpu_custom_call.1} parent=11 // pred_region
          _
        $region36: #{tpu_custom_call.1} parent=11 // pred_fallthru
          _
        // Predicated region
        $region37: #{tpu_custom_call.1} parent=11 // pred_check
          %p249 = pneg %p190
        $region38: #{tpu_custom_call.1} parent=11 // pred_check_branch
          %251 = sbr.rel (%p249) target = $region40
        $region39: #{tpu_custom_call.1} parent=11 // pred_region
          _
        $region40: #{tpu_custom_call.1} parent=11 // pred_fallthru
          _
      $region12: #{tpu_custom_call.1} parent=5 // pred_fallthru
        _
      %p252 = scmp.lt.s32.totalorder %s17, 2
      // Predicated region
      $region41: #{tpu_custom_call.1} parent=5 // pred_check
        %p253 = pneg %p252
      $region42: #{tpu_custom_call.1} parent=5 // pred_check_branch
        %255 = sbr.rel (%p253) target = $region44
      $region43: #{tpu_custom_call.1} parent=5 // pred_region
        // Predicated region
        $region45: #{tpu_custom_call.1} parent=43 // pred_check
          %p256 = pneg %p37
        $region46: #{tpu_custom_call.1} parent=43 // pred_check_branch
          %258 = sbr.rel (%p256) target = $region48
        $region47: #{tpu_custom_call.1} parent=43 // pred_region
          %p259 = scmp.lt.s32.totalorder %s17, 1
          %s260 = scalar_select %p259, %s17, 1
          %s261 = smul.addr %s260, 4
          %s262 = smul.addr %s261, 2
          %s263 = scalar_lea.vmem %s0, %s262
        $region48: #{tpu_custom_call.1} parent=43 // pred_fallthru
          _
      $region44: #{tpu_custom_call.1} parent=5 // pred_fallthru
        _
      %p264 = scmp.le.s32.totalorder 1, %s17
      %p265 = scmp.lt.s32.totalorder %s17, 3
      %p266 = pnand %p264, %p265
      %p267 = pneg %p266
      // Predicated region
      $region49: #{tpu_custom_call.1} parent=5 // pred_check
        _
      $region50: #{tpu_custom_call.1} parent=5 // pred_check_branch
        %269 = sbr.rel (%p266) target = $region52
      $region51: #{tpu_custom_call.1} parent=5 // pred_region
        %s270 = ssub.s32 %s17, 1
        %p271 = scmp.lt.s32.totalorder %s22, 1
        %s272 = scalar_select %p271, %s22, 1
        %s273 = smul.addr %s272, 4
        %s274 = smul.addr %s273, 2
        %s275 = scalar_lea.vmem %s0, %s274
        %p276 = pneg %p43
        %p277 = pneg %p40
        %p278 = pneg %p64
        %p279 = pneg %p61
        %p280 = pneg %p85
        %p281 = pneg %p82
        %p282 = pneg %p106
        %p283 = pneg %p103
        %p284 = pneg %p127
        %p285 = pneg %p124
        %p286 = pneg %p148
        %p287 = pneg %p145
        %p288 = pneg %p169
        %p289 = pneg %p166
        %p290 = pneg %p190
        %p291 = pneg %p187
        %p292 = pneg %p216
        %p293 = pneg %p213
        %s294 = sand.u32 %s203, 1
        %s295 = scalar_lea.sflag [#allocation4], %s294
        %s296 = sand.u32 %s203, 1
        %s297 = smul.addr %s296, 96
        %s298 = scalar_lea.vmem [#allocation3], %s297
        %p299 = scmp.lt.s32.totalorder %s22, 1
        %s300 = scalar_select %p299, %s22, 1
        %s301 = smul.addr %s300, 4
        %s302 = smul.addr %s301, 2
        %s303 = scalar_lea.vmem %s0, %s302
        %v305 = vld [vmem:[%s303] sm:$0xff]
        %v306 = vunpack.c.l.bf16 %v305
        %v307 = vunpack.c.h.bf16 %v305
        %v308 = vld [vmem:[%s1] sm:$0xf]
        %v309 = vld [vmem:[%s2] sm:$0xf]
        %v311 = vcombine.high %v305, %v305
        %v313 = vunpack.c.l.s4 1983009808
        %v314 = vunpack.c.0.s8 %v313
        %v315 = vlaneseq
        %v316 = vshrl.u32 %v315, 7
        %v317 = vsub.s32 %v314, %v316
        %v318 = vrot.slane %v305, %v317
        %v320 = vunpack.c.l.s4 1983009808
        %v321 = vunpack.c.0.s8 %v320
        %v322 = vlaneseq
        %v323 = vshrl.u32 %v322, 7
        %v324 = vsub.s32 %v321, %v323
        %v325 = vrot.slane %v311, %v324
        %v326 = vcombine.high %v318, %v318
        %v327 = vcombine.high %v325, %v325
        %vm328 = vcmask 31744
        %v330 = vsel %vm328, %v309, 0
        %vm332 = vcmask 1041408
        %v334 = vsel %vm332, %v318, 0
        %v337 = vsel %vm332, %v326, 0
        %v340 = vsel %vm332, %v325, 0
        %v343 = vsel %vm332, %v327, 0
        %345 = vmatprep.subr.bf16.mxu0 %v337
        %346 = vmatpush1.bf16.msra.mxu0 %v334
        %347 = vmatprep.subr.bf16.mxu0 0
        %348 = vmatpush1.bf16.msra.mxu0 0
        %349 = vmatprep.subr.bf16.mxu0 0
        %350 = vmatpush1.bf16.msra.mxu0 0
        %351 = vmatprep.subr.bf16.mxu0 0
        %352 = vmatpush1.bf16.msra.mxu0 0
        %353 = vmatprep.subr.bf16.mxu0 0
        %354 = vmatpush1.bf16.msra.mxu0 0
        %355 = vmatprep.subr.bf16.mxu0 0
        %356 = vmatpush1.bf16.msra.mxu0 0
        %357 = vmatprep.subr.bf16.mxu0 0
        %358 = vmatpush1.bf16.msra.mxu0 0
        %359 = vmatprep.subr.bf16.mxu0 0
        %360 = vmatpush1.bf16.msra.mxu0 0
        %361 = vmatprep.subr.bf16.mxu0 0
        %362 = vmatpush1.bf16.msra.mxu0 0
        %363 = vmatprep.subr.bf16.mxu0 0
        %364 = vmatpush1.bf16.msra.mxu0 0
        %365 = vmatprep.subr.bf16.mxu0 0
        %366 = vmatpush1.bf16.msra.mxu0 0
        %367 = vmatprep.subr.bf16.mxu0 0
        %368 = vmatpush1.bf16.msra.mxu0 0
        %369 = vmatprep.subr.bf16.mxu0 0
        %370 = vmatpush1.bf16.msra.mxu0 0
        %371 = vmatprep.subr.bf16.mxu0 0
        %372 = vmatpush1.bf16.msra.mxu0 0
        %373 = vmatprep.subr.bf16.mxu0 0
        %374 = vmatpush1.bf16.msra.mxu0 0
        %375 = vmatprep.subr.bf16.mxu0 0
        %376 = vmatpush1.bf16.msra.mxu0 0
        %377 = vmatprep.mubr.bf16.mxu0 0
        %378 = vmatmul.mubr.bf16.gmra.mrb[0].mxu0 %v330
        %v379 = vpop.f32.mrb[0].mxu0
        %v380 = vadd.f32 0.0, %v379
        %v381 = vpop.f32.mrb[0].mxu0
        %v382 = vadd.f32 0.0, %v381
        %v383 = vpop.f32.mrb[0].mxu0
        %v384 = vpop.f32.mrb[0].mxu0
        %385 = vdwg.mxu0
        %386 = vmatprep.subr.bf16.mxu0 %v343
        %387 = vmatpush1.bf16.msra.mxu0 %v340
        %388 = vmatprep.subr.bf16.mxu0 0
        %389 = vmatpush1.bf16.msra.mxu0 0
        %390 = vmatprep.subr.bf16.mxu0 0
        %391 = vmatpush1.bf16.msra.mxu0 0
        %392 = vmatprep.subr.bf16.mxu0 0
        %393 = vmatpush1.bf16.msra.mxu0 0
        %394 = vmatprep.subr.bf16.mxu0 0
        %395 = vmatpush1.bf16.msra.mxu0 0
        %396 = vmatprep.subr.bf16.mxu0 0
        %397 = vmatpush1.bf16.msra.mxu0 0
        %398 = vmatprep.subr.bf16.mxu0 0
        %399 = vmatpush1.bf16.msra.mxu0 0
        %400 = vmatprep.subr.bf16.mxu0 0
        %401 = vmatpush1.bf16.msra.mxu0 0
        %402 = vmatprep.subr.bf16.mxu0 0
        %403 = vmatpush1.bf16.msra.mxu0 0
        %404 = vmatprep.subr.bf16.mxu0 0
        %405 = vmatpush1.bf16.msra.mxu0 0
        %406 = vmatprep.subr.bf16.mxu0 0
        %407 = vmatpush1.bf16.msra.mxu0 0
        %408 = vmatprep.subr.bf16.mxu0 0
        %409 = vmatpush1.bf16.msra.mxu0 0
        %410 = vmatprep.subr.bf16.mxu0 0
        %411 = vmatpush1.bf16.msra.mxu0 0
        %412 = vmatprep.subr.bf16.mxu0 0
        %413 = vmatpush1.bf16.msra.mxu0 0
        %414 = vmatprep.subr.bf16.mxu0 0
        %415 = vmatpush1.bf16.msra.mxu0 0
        %416 = vmatprep.subr.bf16.mxu0 0
        %417 = vmatpush1.bf16.msra.mxu0 0
        %418 = vmatprep.mubr.bf16.mxu0 0
        %419 = vmatmul.mubr.bf16.gmra.mrb[0].mxu0 %v330
        %v420 = vpop.f32.mrb[0].mxu0
        %v421 = vadd.f32 0.0, %v420
        %v422 = vpop.f32.mrb[0].mxu0
        %v423 = vadd.f32 0.0, %v422
        %v424 = vpop.f32.mrb[0].mxu0
        %v425 = vpop.f32.mrb[0].mxu0
        %426 = vdwg.mxu0
        %v427 = vld [vmem:[%s3] sm:$0xff]
        %429 = vset.pattern.permute.xlu0 0
        %430 = vperm.xlu0 %429, %v427
        %v431 = vpop.permute.xlu0 %430
        %v433 = vmul.f32 %v380, %v431
        %v434 = vmul.f32 %v382, %v431
        %v435 = vmul.f32 %v421, %v431
        %v436 = vmul.f32 %v423, %v431
        %v437 = vld [vmem:[%s4] sm:$0xff]
        %439 = vset.pattern.permute.xlu0 0
        %440 = vperm.xlu0 %439, %v437
        %v441 = vpop.permute.xlu0 %440
        %v443 = vadd.f32 %v433, %v441
        %v444 = vadd.f32 %v434, %v441
        %v445 = vadd.f32 %v435, %v441
        %v446 = vadd.f32 %v436, %v441
        %v447 = vmax.f32 %v443, 0.0
        %v448 = vmax.f32 %v444, 0.0
        %v449 = vmax.f32 %v445, 0.0
        %v450 = vmax.f32 %v446, 0.0
        %v452 = vlaneseq
        %v453 = vshrl.u32 %v452, 7
        %v454 = vsub.s32 0, %v453
        %v455 = vrot.slane %v308, %v454
        %v456 = vlaneseq
        %v457 = vshrl.u32 %v456, 7
        %v458 = vsub.s32 1, %v457
        %v459 = vrot.slane %v308, %v458
        %v460 = vlaneseq
        %v461 = vshrl.u32 %v460, 7
        %v462 = vsub.s32 2, %v461
        %v463 = vrot.slane %v308, %v462
        %v464 = vlaneseq
        %v465 = vshrl.u32 %v464, 7
        %v466 = vsub.s32 3, %v465
        %v467 = vrot.slane %v308, %v466
        %v472 = vmul.f32 %v447, %v455
        %v473 = vmul.f32 %v448, %v459
        %v474 = vmul.f32 %v449, %v463
        %v475 = vmul.f32 %v450, %v467
        %480 = vst [vmem:[#allocation2] sm:$0x3] %v318
        %481 = vst [vmem:[#allocation2 + $0x8] sm:$0x3] %v326
        %482 = vst [vmem:[#allocation2 + $0x10] sm:$0x3] %v325
        %483 = vst [vmem:[#allocation2 + $0x18] sm:$0x3] %v327
        %488 = vrot.lane.b32.xlu0 %v472, 21
        %v489 = vpop.permute.xlu0 %488
        %490 = vrot.lane.b32.xlu0 %v473, 21
        %v491 = vpop.permute.xlu0 %490
        %492 = vrot.lane.b32.xlu0 %v474, 21
        %v493 = vpop.permute.xlu0 %492
        %494 = vrot.lane.b32.xlu0 %v475, 21
        %v495 = vpop.permute.xlu0 %494
        %vm496 = vcmask 171008
        %v497 = vsel %vm496, %v489, %v491
        %v498 = vsel %vm496, %v491, %v493
        %v499 = vsel %vm496, %v493, %v495
        %v505 = vsel %vm496, 0.0, %v489
        %v506 = vsel %vm496, %v495, 0.0
        %v507 = vpack.c.bf16 %v505, %v505
        %v508 = vpack.c.bf16 %v497, %v497
        %v509 = vpack.c.bf16 %v498, %v498
        %v510 = vpack.c.bf16 %v499, %v499
        %v515 = vrot.slane %v507, 6
        %v516 = vrot.slane %v508, 6
        %v517 = vrot.slane %v509, 6
        %v518 = vrot.slane %v510, 6
        %523 = vst [vmem:[#allocation2] sm:$0xc] %v515
        %524 = vst [vmem:[#allocation2 + $0x8] sm:$0xc] %v516
        %525 = vst [vmem:[#allocation2 + $0x10] sm:$0xc] %v517
        %526 = vst [vmem:[#allocation2 + $0x18] sm:$0xc] %v518
        %v527 = vpack.c.bf16 %v506, %v506
        %v529 = vrot.slane %v507, 4
        %v530 = vrot.slane %v508, 4
        %v531 = vrot.slane %v509, 4
        %v532 = vrot.slane %v510, 4
        %v533 = vrot.slane %v527, 4
        %534 = vrot.lane.b32.xlu0 %v529, 127
        %v535 = vpop.permute.xlu0 %534
        %536 = vrot.lane.b32.xlu0 %v530, 127
        %v537 = vpop.permute.xlu0 %536
        %538 = vrot.lane.b32.xlu0 %v531, 127
        %v539 = vpop.permute.xlu0 %538
        %540 = vrot.lane.b32.xlu0 %v532, 127
        %v541 = vpop.permute.xlu0 %540
        %542 = vrot.lane.b32.xlu0 %v533, 127
        %v543 = vpop.permute.xlu0 %542
        %vm544 = vcmask 1039360
        %v545 = vsel %vm544, %v535, %v537
        %v546 = vsel %vm544, %v537, %v539
        %v547 = vsel %vm544, %v539, %v541
        %v548 = vsel %vm544, %v541, %v543
        %553 = vst [vmem:[#allocation2] sm:$0x30] %v545
        %554 = vst [vmem:[#allocation2 + $0x8] sm:$0x30] %v546
        %555 = vst [vmem:[#allocation2 + $0x10] sm:$0x30] %v547
        %556 = vst [vmem:[#allocation2 + $0x18] sm:$0x30] %v548
        %v557 = vrot.slane %v507, 2
        %v558 = vrot.slane %v508, 2
        %v559 = vrot.slane %v509, 2
        %v560 = vrot.slane %v510, 2
        %v561 = vrot.slane %v527, 2
        %562 = vrot.lane.b32.xlu0 %v557, 126
        %v563 = vpop.permute.xlu0 %562
        %564 = vrot.lane.b32.xlu0 %v558, 126
        %v565 = vpop.permute.xlu0 %564
        %566 = vrot.lane.b32.xlu0 %v559, 126
        %v567 = vpop.permute.xlu0 %566
        %568 = vrot.lane.b32.xlu0 %v560, 126
        %v569 = vpop.permute.xlu0 %568
        %570 = vrot.lane.b32.xlu0 %v561, 126
        %v571 = vpop.permute.xlu0 %570
        %vm572 = vcmask 1031168
        %v573 = vsel %vm572, %v563, %v565
        %v574 = vsel %vm572, %v565, %v567
        %v575 = vsel %vm572, %v567, %v569
        %v576 = vsel %vm572, %v569, %v571
        %581 = vst [vmem:[#allocation2] sm:$0xc0] %v573
        %582 = vst [vmem:[#allocation2 + $0x8] sm:$0xc0] %v574
        %583 = vst [vmem:[#allocation2 + $0x10] sm:$0xc0] %v575
        %584 = vst [vmem:[#allocation2 + $0x18] sm:$0xc0] %v576
        %585 = vrot.lane.b32.xlu0 %v507, 108
        %v586 = vpop.permute.xlu0 %585
        %587 = vrot.lane.b32.xlu0 %v508, 108
        %v588 = vpop.permute.xlu0 %587
        %589 = vrot.lane.b32.xlu0 %v509, 108
        %v590 = vpop.permute.xlu0 %589
        %591 = vrot.lane.b32.xlu0 %v510, 108
        %v592 = vpop.permute.xlu0 %591
        %593 = vrot.lane.b32.xlu0 %v527, 108
        %v594 = vpop.permute.xlu0 %593
        %vm595 = vcmask 883712
        %v596 = vsel %vm595, %v586, %v588
        %v597 = vsel %vm595, %v588, %v590
        %v598 = vsel %vm595, %v590, %v592
        %v599 = vsel %vm595, %v592, %v594
        %604 = vst [vmem:[#allocation2 + $0x20] sm:$0x3] %v596
        %605 = vst [vmem:[#allocation2 + $0x28] sm:$0x3] %v597
        %606 = vst [vmem:[#allocation2 + $0x30] sm:$0x3] %v598
        %607 = vst [vmem:[#allocation2 + $0x38] sm:$0x3] %v599
        %v608 = vpack.c.bf16 %v472, %v472
        %v609 = vpack.c.bf16 %v473, %v473
        %v610 = vpack.c.bf16 %v474, %v474
        %v611 = vpack.c.bf16 %v475, %v475
        %v616 = vrot.slane %v608, 6
        %v617 = vrot.slane %v609, 6
        %v618 = vrot.slane %v610, 6
        %v619 = vrot.slane %v611, 6
        %624 = vst [vmem:[#allocation2 + $0x20] sm:$0xc] %v616
        %625 = vst [vmem:[#allocation2 + $0x28] sm:$0xc] %v617
        %626 = vst [vmem:[#allocation2 + $0x30] sm:$0xc] %v618
        %627 = vst [vmem:[#allocation2 + $0x38] sm:$0xc] %v619
        %628 = vrot.lane.b32.xlu0 %v529, 106
        %v629 = vpop.permute.xlu0 %628
        %630 = vrot.lane.b32.xlu0 %v530, 106
        %v631 = vpop.permute.xlu0 %630
        %632 = vrot.lane.b32.xlu0 %v531, 106
        %v633 = vpop.permute.xlu0 %632
        %634 = vrot.lane.b32.xlu0 %v532, 106
        %v635 = vpop.permute.xlu0 %634
        %636 = vrot.lane.b32.xlu0 %v533, 106
        %v637 = vpop.permute.xlu0 %636
        %vm638 = vcmask 867328
        %v639 = vsel %vm638, %v629, %v631
        %v640 = vsel %vm638, %v631, %v633
        %v641 = vsel %vm638, %v633, %v635
        %v642 = vsel %vm638, %v635, %v637
        %647 = vst [vmem:[#allocation2 + $0x20] sm:$0x30] %v639
        %648 = vst [vmem:[#allocation2 + $0x28] sm:$0x30] %v640
        %649 = vst [vmem:[#allocation2 + $0x30] sm:$0x30] %v641
        %650 = vst [vmem:[#allocation2 + $0x38] sm:$0x30] %v642
        %651 = vrot.lane.b32.xlu0 %v557, 88
        %v652 = vpop.permute.xlu0 %651
        %653 = vrot.lane.b32.xlu0 %v558, 88
        %v654 = vpop.permute.xlu0 %653
        %655 = vrot.lane.b32.xlu0 %v559, 88
        %v656 = vpop.permute.xlu0 %655
        %657 = vrot.lane.b32.xlu0 %v560, 88
        %v658 = vpop.permute.xlu0 %657
        %659 = vrot.lane.b32.xlu0 %v561, 88
        %v660 = vpop.permute.xlu0 %659
        %vm661 = vcmask 719872
        %v662 = vsel %vm661, %v652, %v654
        %v663 = vsel %vm661, %v654, %v656
        %v664 = vsel %vm661, %v656, %v658
        %v665 = vsel %vm661, %v658, %v660
        %670 = vst [vmem:[#allocation2 + $0x20] sm:$0xc0] %v662
        %671 = vst [vmem:[#allocation2 + $0x28] sm:$0xc0] %v663
        %672 = vst [vmem:[#allocation2 + $0x30] sm:$0xc0] %v664
        %673 = vst [vmem:[#allocation2 + $0x38] sm:$0xc0] %v665
        %674 = vrot.lane.b32.xlu0 %v507, 87
        %v675 = vpop.permute.xlu0 %674
        %676 = vrot.lane.b32.xlu0 %v508, 87
        %v677 = vpop.permute.xlu0 %676
        %678 = vrot.lane.b32.xlu0 %v509, 87
        %v679 = vpop.permute.xlu0 %678
        %680 = vrot.lane.b32.xlu0 %v510, 87
        %v681 = vpop.permute.xlu0 %680
        %682 = vrot.lane.b32.xlu0 %v527, 87
        %v683 = vpop.permute.xlu0 %682
        %vm684 = vcmask 711680
        %v685 = vsel %vm684, %v675, %v677
        %v686 = vsel %vm684, %v677, %v679
        %v687 = vsel %vm684, %v679, %v681
        %v688 = vsel %vm684, %v681, %v683
        %693 = vst [vmem:[#allocation2 + $0x40] sm:$0x3] %v685
        %694 = vst [vmem:[#allocation2 + $0x48] sm:$0x3] %v686
        %695 = vst [vmem:[#allocation2 + $0x50] sm:$0x3] %v687
        %696 = vst [vmem:[#allocation2 + $0x58] sm:$0x3] %v688
        %v697 = vrot.slane %v527, 6
        %698 = vrot.lane.b32.xlu0 %v515, 86
        %v699 = vpop.permute.xlu0 %698
        %700 = vrot.lane.b32.xlu0 %v516, 86
        %v701 = vpop.permute.xlu0 %700
        %702 = vrot.lane.b32.xlu0 %v517, 86
        %v703 = vpop.permute.xlu0 %702
        %704 = vrot.lane.b32.xlu0 %v518, 86
        %v705 = vpop.permute.xlu0 %704
        %706 = vrot.lane.b32.xlu0 %v697, 86
        %v707 = vpop.permute.xlu0 %706
        %vm708 = vcmask 703488
        %v709 = vsel %vm708, %v699, %v701
        %v710 = vsel %vm708, %v701, %v703
        %v711 = vsel %vm708, %v703, %v705
        %v712 = vsel %vm708, %v705, %v707
        %717 = vst [vmem:[#allocation2 + $0x40] sm:$0xc] %v709
        %718 = vst [vmem:[#allocation2 + $0x48] sm:$0xc] %v710
        %719 = vst [vmem:[#allocation2 + $0x50] sm:$0xc] %v711
        %720 = vst [vmem:[#allocation2 + $0x58] sm:$0xc] %v712
        %v721 = vrot.slane %v472, 4
        %v722 = vrot.slane %v473, 4
        %v723 = vrot.slane %v474, 4
        %v724 = vrot.slane %v475, 4
        %725 = vrot.lane.b32.xlu0 %v721, 42
        %v726 = vpop.permute.xlu0 %725
        %727 = vrot.lane.b32.xlu0 %v722, 42
        %v728 = vpop.permute.xlu0 %727
        %729 = vrot.lane.b32.xlu0 %v723, 42
        %v730 = vpop.permute.xlu0 %729
        %731 = vrot.lane.b32.xlu0 %v724, 42
        %v732 = vpop.permute.xlu0 %731
        %vm733 = vcmask 343040
        %v734 = vsel %vm733, %v726, %v728
        %v735 = vsel %vm733, %v728, %v730
        %v736 = vsel %vm733, %v730, %v732
        %v742 = vsel %vm733, 0.0, %v726
        %v743 = vsel %vm733, %v732, 0.0
        %v744 = vpack.c.bf16 %v742, %v742
        %v745 = vpack.c.bf16 %v734, %v734
        %v746 = vpack.c.bf16 %v735, %v735
        %v747 = vpack.c.bf16 %v736, %v736
        %v752 = vrot.slane %v744, 4
        %v753 = vrot.slane %v745, 4
        %v754 = vrot.slane %v746, 4
        %v755 = vrot.slane %v747, 4
        %760 = vst [vmem:[#allocation2 + $0x40] sm:$0x30] %v752
        %761 = vst [vmem:[#allocation2 + $0x48] sm:$0x30] %v753
        %762 = vst [vmem:[#allocation2 + $0x50] sm:$0x30] %v754
        %763 = vst [vmem:[#allocation2 + $0x58] sm:$0x30] %v755
        %v764 = vpack.c.bf16 %v743, %v743
        %v766 = vrot.slane %v744, 2
        %v767 = vrot.slane %v745, 2
        %v768 = vrot.slane %v746, 2
        %v769 = vrot.slane %v747, 2
        %v770 = vrot.slane %v764, 2
        %771 = vrot.lane.b32.xlu0 %v766, 127
        %v772 = vpop.permute.xlu0 %771
        %773 = vrot.lane.b32.xlu0 %v767, 127
        %v774 = vpop.permute.xlu0 %773
        %775 = vrot.lane.b32.xlu0 %v768, 127
        %v776 = vpop.permute.xlu0 %775
        %777 = vrot.lane.b32.xlu0 %v769, 127
        %v778 = vpop.permute.xlu0 %777
        %779 = vrot.lane.b32.xlu0 %v770, 127
        %v780 = vpop.permute.xlu0 %779
        %v781 = vsel %vm544, %v772, %v774
        %v782 = vsel %vm544, %v774, %v776
        %v783 = vsel %vm544, %v776, %v778
        %v784 = vsel %vm544, %v778, %v780
        %789 = vst [vmem:[#allocation2 + $0x40] sm:$0xc0] %v781
        %790 = vst [vmem:[#allocation2 + $0x48] sm:$0xc0] %v782
        %791 = vst [vmem:[#allocation2 + $0x50] sm:$0xc0] %v783
        %792 = vst [vmem:[#allocation2 + $0x58] sm:$0xc0] %v784
        %793 = vrot.lane.b32.xlu0 %v744, 126
        %v794 = vpop.permute.xlu0 %793
        %795 = vrot.lane.b32.xlu0 %v745, 126
        %v796 = vpop.permute.xlu0 %795
        %797 = vrot.lane.b32.xlu0 %v746, 126
        %v798 = vpop.permute.xlu0 %797
        %799 = vrot.lane.b32.xlu0 %v747, 126
        %v800 = vpop.permute.xlu0 %799
        %801 = vrot.lane.b32.xlu0 %v764, 126
        %v802 = vpop.permute.xlu0 %801
        %v803 = vsel %vm572, %v794, %v796
        %v804 = vsel %vm572, %v796, %v798
        %v805 = vsel %vm572, %v798, %v800
        %v806 = vsel %vm572, %v800, %v802
        %811 = vst [vmem:[#allocation2 + $0x60] sm:$0x3] %v803
        %812 = vst [vmem:[#allocation2 + $0x68] sm:$0x3] %v804
        %813 = vst [vmem:[#allocation2 + $0x70] sm:$0x3] %v805
        %814 = vst [vmem:[#allocation2 + $0x78] sm:$0x3] %v806
        %v815 = vrot.slane %v744, 6
        %v816 = vrot.slane %v745, 6
        %v817 = vrot.slane %v746, 6
        %v818 = vrot.slane %v747, 6
        %v819 = vrot.slane %v764, 6
        %820 = vrot.lane.b32.xlu0 %v815, 125
        %v821 = vpop.permute.xlu0 %820
        %822 = vrot.lane.b32.xlu0 %v816, 125
        %v823 = vpop.permute.xlu0 %822
        %824 = vrot.lane.b32.xlu0 %v817, 125
        %v825 = vpop.permute.xlu0 %824
        %826 = vrot.lane.b32.xlu0 %v818, 125
        %v827 = vpop.permute.xlu0 %826
        %828 = vrot.lane.b32.xlu0 %v819, 125
        %v829 = vpop.permute.xlu0 %828
        %vm830 = vcmask 1022976
        %v831 = vsel %vm830, %v821, %v823
        %v832 = vsel %vm830, %v823, %v825
        %v833 = vsel %vm830, %v825, %v827
        %v834 = vsel %vm830, %v827, %v829
        %839 = vst [vmem:[#allocation2 + $0x60] sm:$0xc] %v831
        %840 = vst [vmem:[#allocation2 + $0x68] sm:$0xc] %v832
        %841 = vst [vmem:[#allocation2 + $0x70] sm:$0xc] %v833
        %842 = vst [vmem:[#allocation2 + $0x78] sm:$0xc] %v834
        %v843 = vrot.slane %v764, 4
        %844 = vrot.lane.b32.xlu0 %v752, 124
        %v845 = vpop.permute.xlu0 %844
        %846 = vrot.lane.b32.xlu0 %v753, 124
        %v847 = vpop.permute.xlu0 %846
        %848 = vrot.lane.b32.xlu0 %v754, 124
        %v849 = vpop.permute.xlu0 %848
        %850 = vrot.lane.b32.xlu0 %v755, 124
        %v851 = vpop.permute.xlu0 %850
        %852 = vrot.lane.b32.xlu0 %v843, 124
        %v853 = vpop.permute.xlu0 %852
        %vm854 = vcmask 1014784
        %v855 = vsel %vm854, %v845, %v847
        %v856 = vsel %vm854, %v847, %v849
        %v857 = vsel %vm854, %v849, %v851
        %v858 = vsel %vm854, %v851, %v853
        %863 = vst [vmem:[#allocation2 + $0x60] sm:$0x30] %v855
        %864 = vst [vmem:[#allocation2 + $0x68] sm:$0x30] %v856
        %865 = vst [vmem:[#allocation2 + $0x70] sm:$0x30] %v857
        %866 = vst [vmem:[#allocation2 + $0x78] sm:$0x30] %v858
        %867 = vrot.lane.b32.xlu0 %v766, 108
        %v868 = vpop.permute.xlu0 %867
        %869 = vrot.lane.b32.xlu0 %v767, 108
        %v870 = vpop.permute.xlu0 %869
        %871 = vrot.lane.b32.xlu0 %v768, 108
        %v872 = vpop.permute.xlu0 %871
        %873 = vrot.lane.b32.xlu0 %v769, 108
        %v874 = vpop.permute.xlu0 %873
        %875 = vrot.lane.b32.xlu0 %v770, 108
        %v876 = vpop.permute.xlu0 %875
        %v877 = vsel %vm595, %v868, %v870
        %v878 = vsel %vm595, %v870, %v872
        %v879 = vsel %vm595, %v872, %v874
        %v880 = vsel %vm595, %v874, %v876
        %885 = vst [vmem:[#allocation2 + $0x60] sm:$0xc0] %v877
        %886 = vst [vmem:[#allocation2 + $0x68] sm:$0xc0] %v878
        %887 = vst [vmem:[#allocation2 + $0x70] sm:$0xc0] %v879
        %888 = vst [vmem:[#allocation2 + $0x78] sm:$0xc0] %v880
        %889 = vrot.lane.b32.xlu0 %v744, 107
        %v890 = vpop.permute.xlu0 %889
        %891 = vrot.lane.b32.xlu0 %v745, 107
        %v892 = vpop.permute.xlu0 %891
        %893 = vrot.lane.b32.xlu0 %v746, 107
        %v894 = vpop.permute.xlu0 %893
        %895 = vrot.lane.b32.xlu0 %v747, 107
        %v896 = vpop.permute.xlu0 %895
        %897 = vrot.lane.b32.xlu0 %v764, 107
        %v898 = vpop.permute.xlu0 %897
        %vm899 = vcmask 875520
        %v900 = vsel %vm899, %v890, %v892
        %v901 = vsel %vm899, %v892, %v894
        %v902 = vsel %vm899, %v894, %v896
        %v903 = vsel %vm899, %v896, %v898
        %908 = vst [vmem:[#allocation2 + $0x80] sm:$0x3] %v900
        %909 = vst [vmem:[#allocation2 + $0x88] sm:$0x3] %v901
        %910 = vst [vmem:[#allocation2 + $0x90] sm:$0x3] %v902
        %911 = vst [vmem:[#allocation2 + $0x98] sm:$0x3] %v903
        %912 = vrot.lane.b32.xlu0 %v815, 106
        %v913 = vpop.permute.xlu0 %912
        %914 = vrot.lane.b32.xlu0 %v816, 106
        %v915 = vpop.permute.xlu0 %914
        %916 = vrot.lane.b32.xlu0 %v817, 106
        %v917 = vpop.permute.xlu0 %916
        %918 = vrot.lane.b32.xlu0 %v818, 106
        %v919 = vpop.permute.xlu0 %918
        %920 = vrot.lane.b32.xlu0 %v819, 106
        %v921 = vpop.permute.xlu0 %920
        %v922 = vsel %vm638, %v913, %v915
        %v923 = vsel %vm638, %v915, %v917
        %v924 = vsel %vm638, %v917, %v919
        %v925 = vsel %vm638, %v919, %v921
        %930 = vst [vmem:[#allocation2 + $0x80] sm:$0xc] %v922
        %931 = vst [vmem:[#allocation2 + $0x88] sm:$0xc] %v923
        %932 = vst [vmem:[#allocation2 + $0x90] sm:$0xc] %v924
        %933 = vst [vmem:[#allocation2 + $0x98] sm:$0xc] %v925
        %934 = vrot.lane.b32.xlu0 %v752, 105
        %v935 = vpop.permute.xlu0 %934
        %936 = vrot.lane.b32.xlu0 %v753, 105
        %v937 = vpop.permute.xlu0 %936
        %938 = vrot.lane.b32.xlu0 %v754, 105
        %v939 = vpop.permute.xlu0 %938
        %940 = vrot.lane.b32.xlu0 %v755, 105
        %v941 = vpop.permute.xlu0 %940
        %942 = vrot.lane.b32.xlu0 %v843, 105
        %v943 = vpop.permute.xlu0 %942
        %vm944 = vcmask 859136
        %v945 = vsel %vm944, %v935, %v937
        %v946 = vsel %vm944, %v937, %v939
        %v947 = vsel %vm944, %v939, %v941
        %v948 = vsel %vm944, %v941, %v943
        %953 = vst [vmem:[#allocation2 + $0x80] sm:$0x30] %v945
        %954 = vst [vmem:[#allocation2 + $0x88] sm:$0x30] %v946
        %955 = vst [vmem:[#allocation2 + $0x90] sm:$0x30] %v947
        %956 = vst [vmem:[#allocation2 + $0x98] sm:$0x30] %v948
        %957 = vrot.lane.b32.xlu0 %v766, 104
        %v958 = vpop.permute.xlu0 %957
        %959 = vrot.lane.b32.xlu0 %v767, 104
        %v960 = vpop.permute.xlu0 %959
        %961 = vrot.lane.b32.xlu0 %v768, 104
        %v962 = vpop.permute.xlu0 %961
        %963 = vrot.lane.b32.xlu0 %v769, 104
        %v964 = vpop.permute.xlu0 %963
        %965 = vrot.lane.b32.xlu0 %v770, 104
        %v966 = vpop.permute.xlu0 %965
        %vm967 = vcmask 850944
        %v968 = vsel %vm967, %v958, %v960
        %v969 = vsel %vm967, %v960, %v962
        %v970 = vsel %vm967, %v962, %v964
        %v971 = vsel %vm967, %v964, %v966
        %976 = vst [vmem:[#allocation2 + $0x80] sm:$0xc0] %v968
        %977 = vst [vmem:[#allocation2 + $0x88] sm:$0xc0] %v969
        %978 = vst [vmem:[#allocation2 + $0x90] sm:$0xc0] %v970
        %979 = vst [vmem:[#allocation2 + $0x98] sm:$0xc0] %v971
        %980 = vrot.lane.b32.xlu0 %v744, 88
        %v981 = vpop.permute.xlu0 %980
        %982 = vrot.lane.b32.xlu0 %v745, 88
        %v983 = vpop.permute.xlu0 %982
        %984 = vrot.lane.b32.xlu0 %v746, 88
        %v985 = vpop.permute.xlu0 %984
        %986 = vrot.lane.b32.xlu0 %v747, 88
        %v987 = vpop.permute.xlu0 %986
        %988 = vrot.lane.b32.xlu0 %v764, 88
        %v989 = vpop.permute.xlu0 %988
        %v990 = vsel %vm661, %v981, %v983
        %v991 = vsel %vm661, %v983, %v985
        %v992 = vsel %vm661, %v985, %v987
        %v993 = vsel %vm661, %v987, %v989
        %998 = vst [vmem:[#allocation2 + $0xa0] sm:$0x3] %v990
        %999 = vst [vmem:[#allocation2 + $0xa8] sm:$0x3] %v991
        %1000 = vst [vmem:[#allocation2 + $0xb0] sm:$0x3] %v992
        %1001 = vst [vmem:[#allocation2 + $0xb8] sm:$0x3] %v993
        %1002 = vrot.lane.b32.xlu0 %v815, 87
        %v1003 = vpop.permute.xlu0 %1002
        %1004 = vrot.lane.b32.xlu0 %v816, 87
        %v1005 = vpop.permute.xlu0 %1004
        %1006 = vrot.lane.b32.xlu0 %v817, 87
        %v1007 = vpop.permute.xlu0 %1006
        %1008 = vrot.lane.b32.xlu0 %v818, 87
        %v1009 = vpop.permute.xlu0 %1008
        %1010 = vrot.lane.b32.xlu0 %v819, 87
        %v1011 = vpop.permute.xlu0 %1010
        %v1012 = vsel %vm684, %v1003, %v1005
        %v1013 = vsel %vm684, %v1005, %v1007
        %v1014 = vsel %vm684, %v1007, %v1009
        %v1015 = vsel %vm684, %v1009, %v1011
        %1020 = vst [vmem:[#allocation2 + $0xa0] sm:$0xc] %v1012
        %1021 = vst [vmem:[#allocation2 + $0xa8] sm:$0xc] %v1013
        %1022 = vst [vmem:[#allocation2 + $0xb0] sm:$0xc] %v1014
        %1023 = vst [vmem:[#allocation2 + $0xb8] sm:$0xc] %v1015
        %1024 = vst [vmem:[#allocation2 + $0xa0] sm:$0x30] %v616
        %1025 = vst [vmem:[#allocation2 + $0xa8] sm:$0x30] %v617
        %1026 = vst [vmem:[#allocation2 + $0xb0] sm:$0x30] %v618
        %1027 = vst [vmem:[#allocation2 + $0xb8] sm:$0x30] %v619
        %1028 = vrot.lane.b32.xlu0 %v766, 85
        %v1029 = vpop.permute.xlu0 %1028
        %1030 = vrot.lane.b32.xlu0 %v767, 85
        %v1031 = vpop.permute.xlu0 %1030
        %1032 = vrot.lane.b32.xlu0 %v768, 85
        %v1033 = vpop.permute.xlu0 %1032
        %1034 = vrot.lane.b32.xlu0 %v769, 85
        %v1035 = vpop.permute.xlu0 %1034
        %1036 = vrot.lane.b32.xlu0 %v770, 85
        %v1037 = vpop.permute.xlu0 %1036
        %vm1038 = vcmask 695296
        %v1039 = vsel %vm1038, %v1029, %v1031
        %v1040 = vsel %vm1038, %v1031, %v1033
        %v1041 = vsel %vm1038, %v1033, %v1035
        %v1042 = vsel %vm1038, %v1035, %v1037
        %1047 = vst [vmem:[#allocation2 + $0xa0] sm:$0xc0] %v1039
        %1048 = vst [vmem:[#allocation2 + $0xa8] sm:$0xc0] %v1040
        %1049 = vst [vmem:[#allocation2 + $0xb0] sm:$0xc0] %v1041
        %1050 = vst [vmem:[#allocation2 + $0xb8] sm:$0xc0] %v1042
        %1051 = vrot.lane.b32.xlu0 %v744, 84
        %v1052 = vpop.permute.xlu0 %1051
        %1053 = vrot.lane.b32.xlu0 %v745, 84
        %v1054 = vpop.permute.xlu0 %1053
        %1055 = vrot.lane.b32.xlu0 %v746, 84
        %v1056 = vpop.permute.xlu0 %1055
        %1057 = vrot.lane.b32.xlu0 %v747, 84
        %v1058 = vpop.permute.xlu0 %1057
        %1059 = vrot.lane.b32.xlu0 %v764, 84
        %v1060 = vpop.permute.xlu0 %1059
        %vm1061 = vcmask 687104
        %v1062 = vsel %vm1061, %v1052, %v1054
        %v1063 = vsel %vm1061, %v1054, %v1056
        %v1064 = vsel %vm1061, %v1056, %v1058
        %v1065 = vsel %vm1061, %v1058, %v1060
        %1070 = vst [vmem:[#allocation2 + $0xc0] sm:$0x3] %v1062
        %1071 = vst [vmem:[#allocation2 + $0xc8] sm:$0x3] %v1063
        %1072 = vst [vmem:[#allocation2 + $0xd0] sm:$0x3] %v1064
        %1073 = vst [vmem:[#allocation2 + $0xd8] sm:$0x3] %v1065
        %1074 = vrot.lane.b32.xlu0 %v815, 68
        %v1075 = vpop.permute.xlu0 %1074
        %1076 = vrot.lane.b32.xlu0 %v816, 68
        %v1077 = vpop.permute.xlu0 %1076
        %1078 = vrot.lane.b32.xlu0 %v817, 68
        %v1079 = vpop.permute.xlu0 %1078
        %1080 = vrot.lane.b32.xlu0 %v818, 68
        %v1081 = vpop.permute.xlu0 %1080
        %1082 = vrot.lane.b32.xlu0 %v819, 68
        %v1083 = vpop.permute.xlu0 %1082
        %vm1084 = vcmask 556032
        %v1085 = vsel %vm1084, %v1075, %v1077
        %v1086 = vsel %vm1084, %v1077, %v1079
        %v1087 = vsel %vm1084, %v1079, %v1081
        %v1088 = vsel %vm1084, %v1081, %v1083
        %1093 = vst [vmem:[#allocation2 + $0xc0] sm:$0xc] %v1085
        %1094 = vst [vmem:[#allocation2 + $0xc8] sm:$0xc] %v1086
        %1095 = vst [vmem:[#allocation2 + $0xd0] sm:$0xc] %v1087
        %1096 = vst [vmem:[#allocation2 + $0xd8] sm:$0xc] %v1088
        %1097 = vrot.lane.b32.xlu0 %v752, 67
        %v1098 = vpop.permute.xlu0 %1097
        %1099 = vrot.lane.b32.xlu0 %v753, 67
        %v1100 = vpop.permute.xlu0 %1099
        %1101 = vrot.lane.b32.xlu0 %v754, 67
        %v1102 = vpop.permute.xlu0 %1101
        %1103 = vrot.lane.b32.xlu0 %v755, 67
        %v1104 = vpop.permute.xlu0 %1103
        %1105 = vrot.lane.b32.xlu0 %v843, 67
        %v1106 = vpop.permute.xlu0 %1105
        %vm1107 = vcmask 547840
        %v1108 = vsel %vm1107, %v1098, %v1100
        %v1109 = vsel %vm1107, %v1100, %v1102
        %v1110 = vsel %vm1107, %v1102, %v1104
        %v1111 = vsel %vm1107, %v1104, %v1106
        %1116 = vst [vmem:[#allocation2 + $0xc0] sm:$0x30] %v1108
        %1117 = vst [vmem:[#allocation2 + $0xc8] sm:$0x30] %v1109
        %1118 = vst [vmem:[#allocation2 + $0xd0] sm:$0x30] %v1110
        %1119 = vst [vmem:[#allocation2 + $0xd8] sm:$0x30] %v1111
        %1120 = vrot.lane.b32.xlu0 %v766, 66
        %v1121 = vpop.permute.xlu0 %1120
        %1122 = vrot.lane.b32.xlu0 %v767, 66
        %v1123 = vpop.permute.xlu0 %1122
        %1124 = vrot.lane.b32.xlu0 %v768, 66
        %v1125 = vpop.permute.xlu0 %1124
        %1126 = vrot.lane.b32.xlu0 %v769, 66
        %v1127 = vpop.permute.xlu0 %1126
        %1128 = vrot.lane.b32.xlu0 %v770, 66
        %v1129 = vpop.permute.xlu0 %1128
        %vm1130 = vcmask 539648
        %v1131 = vsel %vm1130, %v1121, %v1123
        %v1132 = vsel %vm1130, %v1123, %v1125
        %v1133 = vsel %vm1130, %v1125, %v1127
        %v1134 = vsel %vm1130, %v1127, %v1129
        %1139 = vst [vmem:[#allocation2 + $0xc0] sm:$0xc0] %v1131
        %1140 = vst [vmem:[#allocation2 + $0xc8] sm:$0xc0] %v1132
        %1141 = vst [vmem:[#allocation2 + $0xd0] sm:$0xc0] %v1133
        %1142 = vst [vmem:[#allocation2 + $0xd8] sm:$0xc0] %v1134
        %1143 = vrot.lane.b32.xlu0 %v744, 65
        %v1144 = vpop.permute.xlu0 %1143
        %1145 = vrot.lane.b32.xlu0 %v745, 65
        %v1146 = vpop.permute.xlu0 %1145
        %1147 = vrot.lane.b32.xlu0 %v746, 65
        %v1148 = vpop.permute.xlu0 %1147
        %1149 = vrot.lane.b32.xlu0 %v747, 65
        %v1150 = vpop.permute.xlu0 %1149
        %1151 = vrot.lane.b32.xlu0 %v764, 65
        %v1152 = vpop.permute.xlu0 %1151
        %vm1153 = vcmask 531456
        %v1154 = vsel %vm1153, %v1144, %v1146
        %v1155 = vsel %vm1153, %v1146, %v1148
        %v1156 = vsel %vm1153, %v1148, %v1150
        %v1157 = vsel %vm1153, %v1150, %v1152
        %1162 = vst [vmem:[#allocation2 + $0xe0] sm:$0x3] %v1154
        %1163 = vst [vmem:[#allocation2 + $0xe8] sm:$0x3] %v1155
        %1164 = vst [vmem:[#allocation2 + $0xf0] sm:$0x3] %v1156
        %1165 = vst [vmem:[#allocation2 + $0xf8] sm:$0x3] %v1157
        %1166 = vrot.lane.b32.xlu0 %v815, 64
        %v1167 = vpop.permute.xlu0 %1166
        %1168 = vrot.lane.b32.xlu0 %v816, 64
        %v1169 = vpop.permute.xlu0 %1168
        %1170 = vrot.lane.b32.xlu0 %v817, 64
        %v1171 = vpop.permute.xlu0 %1170
        %1172 = vrot.lane.b32.xlu0 %v818, 64
        %v1173 = vpop.permute.xlu0 %1172
        %1174 = vrot.lane.b32.xlu0 %v819, 64
        %v1175 = vpop.permute.xlu0 %1174
        %vm1176 = vcmask 523264
        %v1177 = vsel %vm1176, %v1167, %v1169
        %v1178 = vsel %vm1176, %v1169, %v1171
        %v1179 = vsel %vm1176, %v1171, %v1173
        %v1180 = vsel %vm1176, %v1173, %v1175
        %1185 = vst [vmem:[#allocation2 + $0xe0] sm:$0xc] %v1177
        %1186 = vst [vmem:[#allocation2 + $0xe8] sm:$0xc] %v1178
        %1187 = vst [vmem:[#allocation2 + $0xf0] sm:$0xc] %v1179
        %1188 = vst [vmem:[#allocation2 + $0xf8] sm:$0xc] %v1180
        %1189 = vrot.lane.b32.xlu0 %v752, 48
        %v1190 = vpop.permute.xlu0 %1189
        %1191 = vrot.lane.b32.xlu0 %v753, 48
        %v1192 = vpop.permute.xlu0 %1191
        %1193 = vrot.lane.b32.xlu0 %v754, 48
        %v1194 = vpop.permute.xlu0 %1193
        %1195 = vrot.lane.b32.xlu0 %v755, 48
        %v1196 = vpop.permute.xlu0 %1195
        %1197 = vrot.lane.b32.xlu0 %v843, 48
        %v1198 = vpop.permute.xlu0 %1197
        %vm1199 = vcmask 392192
        %v1200 = vsel %vm1199, %v1190, %v1192
        %v1201 = vsel %vm1199, %v1192, %v1194
        %v1202 = vsel %vm1199, %v1194, %v1196
        %v1203 = vsel %vm1199, %v1196, %v1198
        %1208 = vst [vmem:[#allocation2 + $0xe0] sm:$0x30] %v1200
        %1209 = vst [vmem:[#allocation2 + $0xe8] sm:$0x30] %v1201
        %1210 = vst [vmem:[#allocation2 + $0xf0] sm:$0x30] %v1202
        %1211 = vst [vmem:[#allocation2 + $0xf8] sm:$0x30] %v1203
        %1212 = vrot.lane.b32.xlu0 %v766, 47
        %v1213 = vpop.permute.xlu0 %1212
        %1214 = vrot.lane.b32.xlu0 %v767, 47
        %v1215 = vpop.permute.xlu0 %1214
        %1216 = vrot.lane.b32.xlu0 %v768, 47
        %v1217 = vpop.permute.xlu0 %1216
        %1218 = vrot.lane.b32.xlu0 %v769, 47
        %v1219 = vpop.permute.xlu0 %1218
        %1220 = vrot.lane.b32.xlu0 %v770, 47
        %v1221 = vpop.permute.xlu0 %1220
        %vm1222 = vcmask 384000
        %v1223 = vsel %vm1222, %v1213, %v1215
        %v1224 = vsel %vm1222, %v1215, %v1217
        %v1225 = vsel %vm1222, %v1217, %v1219
        %v1226 = vsel %vm1222, %v1219, %v1221
        %1231 = vst [vmem:[#allocation2 + $0xe0] sm:$0xc0] %v1223
        %1232 = vst [vmem:[#allocation2 + $0xe8] sm:$0xc0] %v1224
        %1233 = vst [vmem:[#allocation2 + $0xf0] sm:$0xc0] %v1225
        %1234 = vst [vmem:[#allocation2 + $0xf8] sm:$0xc0] %v1226
        %1235 = vrot.lane.b32.xlu0 %v744, 46
        %v1236 = vpop.permute.xlu0 %1235
        %1237 = vrot.lane.b32.xlu0 %v745, 46
        %v1238 = vpop.permute.xlu0 %1237
        %1239 = vrot.lane.b32.xlu0 %v746, 46
        %v1240 = vpop.permute.xlu0 %1239
        %1241 = vrot.lane.b32.xlu0 %v747, 46
        %v1242 = vpop.permute.xlu0 %1241
        %1243 = vrot.lane.b32.xlu0 %v764, 46
        %v1244 = vpop.permute.xlu0 %1243
        %vm1245 = vcmask 375808
        %v1246 = vsel %vm1245, %v1236, %v1238
        %v1247 = vsel %vm1245, %v1238, %v1240
        %v1248 = vsel %vm1245, %v1240, %v1242
        %v1249 = vsel %vm1245, %v1242, %v1244
        %1254 = vst [vmem:[#allocation2 + $0x100] sm:$0x3] %v1246
        %1255 = vst [vmem:[#allocation2 + $0x108] sm:$0x3] %v1247
        %1256 = vst [vmem:[#allocation2 + $0x110] sm:$0x3] %v1248
        %1257 = vst [vmem:[#allocation2 + $0x118] sm:$0x3] %v1249
        %1258 = vrot.lane.b32.xlu0 %v815, 45
        %v1259 = vpop.permute.xlu0 %1258
        %1260 = vrot.lane.b32.xlu0 %v816, 45
        %v1261 = vpop.permute.xlu0 %1260
        %1262 = vrot.lane.b32.xlu0 %v817, 45
        %v1263 = vpop.permute.xlu0 %1262
        %1264 = vrot.lane.b32.xlu0 %v818, 45
        %v1265 = vpop.permute.xlu0 %1264
        %1266 = vrot.lane.b32.xlu0 %v819, 45
        %v1267 = vpop.permute.xlu0 %1266
        %vm1268 = vcmask 367616
        %v1269 = vsel %vm1268, %v1259, %v1261
        %v1270 = vsel %vm1268, %v1261, %v1263
        %v1271 = vsel %vm1268, %v1263, %v1265
        %v1272 = vsel %vm1268, %v1265, %v1267
        %1277 = vst [vmem:[#allocation2 + $0x100] sm:$0xc] %v1269
        %1278 = vst [vmem:[#allocation2 + $0x108] sm:$0xc] %v1270
        %1279 = vst [vmem:[#allocation2 + $0x110] sm:$0xc] %v1271
        %1280 = vst [vmem:[#allocation2 + $0x118] sm:$0xc] %v1272
        %1281 = vrot.lane.b32.xlu0 %v752, 44
        %v1282 = vpop.permute.xlu0 %1281
        %1283 = vrot.lane.b32.xlu0 %v753, 44
        %v1284 = vpop.permute.xlu0 %1283
        %1285 = vrot.lane.b32.xlu0 %v754, 44
        %v1286 = vpop.permute.xlu0 %1285
        %1287 = vrot.lane.b32.xlu0 %v755, 44
        %v1288 = vpop.permute.xlu0 %1287
        %1289 = vrot.lane.b32.xlu0 %v843, 44
        %v1290 = vpop.permute.xlu0 %1289
        %vm1291 = vcmask 359424
        %v1292 = vsel %vm1291, %v1282, %v1284
        %v1293 = vsel %vm1291, %v1284, %v1286
        %v1294 = vsel %vm1291, %v1286, %v1288
        %v1295 = vsel %vm1291, %v1288, %v1290
        %1300 = vst [vmem:[#allocation2 + $0x100] sm:$0x30] %v1292
        %1301 = vst [vmem:[#allocation2 + $0x108] sm:$0x30] %v1293
        %1302 = vst [vmem:[#allocation2 + $0x110] sm:$0x30] %v1294
        %1303 = vst [vmem:[#allocation2 + $0x118] sm:$0x30] %v1295
        %vm1304 = vcmp.gt.f32.partialorder %v308, 0.0
        %v1305 = vsel %vm1304, 1, 0
        %v1306 = vlaneseq
        %v1307 = vshrl.u32 %v1306, 7
        %v1308 = vsub.s32 0, %v1307
        %v1309 = vrot.slane %v1305, %v1308
        %v1310 = vlaneseq
        %v1311 = vshrl.u32 %v1310, 7
        %v1312 = vsub.s32 1, %v1311
        %v1313 = vrot.slane %v1305, %v1312
        %v1314 = vlaneseq
        %v1315 = vshrl.u32 %v1314, 7
        %v1316 = vsub.s32 2, %v1315
        %v1317 = vrot.slane %v1305, %v1316
        %v1318 = vlaneseq
        %v1319 = vshrl.u32 %v1318, 7
        %v1320 = vsub.s32 3, %v1319
        %v1321 = vrot.slane %v1305, %v1320
        %vm1322 = vcmp.eq.s32.totalorder %v1309, 1
        %vm1323 = vcmp.eq.s32.totalorder %v1313, 1
        %vm1324 = vcmp.eq.s32.totalorder %v1317, 1
        %vm1325 = vcmp.eq.s32.totalorder %v1321, 1
        %v1328 = vcombine.high %v306, %v306
        %v1329 = vcombine.high %v307, %v307
        %v1332 = vsel %vm1322, %v306, -1e+30
        %v1333 = vsel %vm1323, %v1328, -1e+30
        %v1334 = vsel %vm1324, %v307, -1e+30
        %v1335 = vsel %vm1325, %v1329, -1e+30
        %1340 = vrot.lane.b32.xlu0 %v1332, 2
        %v1341 = vpop.permute.xlu0 %1340
        %1342 = vrot.lane.b32.xlu0 %v1333, 2
        %v1343 = vpop.permute.xlu0 %1342
        %1344 = vrot.lane.b32.xlu0 %v1334, 2
        %v1345 = vpop.permute.xlu0 %1344
        %1346 = vrot.lane.b32.xlu0 %v1335, 2
        %v1347 = vpop.permute.xlu0 %1346
        %vm1348 = vcmask 15360
        %v1349 = vsel %vm1348, %v1341, %v1343
        %v1350 = vsel %vm1348, %v1343, %v1345
        %v1351 = vsel %vm1348, %v1345, %v1347
        %v1357 = vsel %vm1348, 0.0, %v1341
        %v1358 = vsel %vm1348, %v1347, 0.0
        %1359 = vrot.lane.b32.xlu0 %v1332, 1
        %v1360 = vpop.permute.xlu0 %1359
        %1361 = vrot.lane.b32.xlu0 %v1333, 1
        %v1362 = vpop.permute.xlu0 %1361
        %1363 = vrot.lane.b32.xlu0 %v1334, 1
        %v1364 = vpop.permute.xlu0 %1363
        %1365 = vrot.lane.b32.xlu0 %v1335, 1
        %v1366 = vpop.permute.xlu0 %1365
        %vm1367 = vcmask 7168
        %v1368 = vsel %vm1367, %v1360, %v1362
        %v1369 = vsel %vm1367, %v1362, %v1364
        %v1370 = vsel %vm1367, %v1364, %v1366
        %v1376 = vmax.f32 %v1357, %v1360
        %v1377 = vmax.f32 %v1349, %v1368
        %v1378 = vmax.f32 %v1350, %v1369
        %v1379 = vmax.f32 %v1351, %v1370
        %v1380 = vmax.f32 %v1358, %v1366
        %1383 = vrot.lane.b32.xlu0 %v1357, 126
        %v1384 = vpop.permute.xlu0 %1383
        %1385 = vrot.lane.b32.xlu0 %v1349, 126
        %v1386 = vpop.permute.xlu0 %1385
        %1387 = vrot.lane.b32.xlu0 %v1350, 126
        %v1388 = vpop.permute.xlu0 %1387
        %1389 = vrot.lane.b32.xlu0 %v1351, 126
        %v1390 = vpop.permute.xlu0 %1389
        %1391 = vrot.lane.b32.xlu0 %v1358, 126
        %v1392 = vpop.permute.xlu0 %1391
        %vm1393 = vcmask 1031168
        %v1394 = vsel %vm1393, %v1384, %v1386
        %v1395 = vsel %vm1393, %v1386, %v1388
        %v1396 = vsel %vm1393, %v1388, %v1390
        %v1397 = vsel %vm1393, %v1390, %v1392
        %v1403 = vmax.f32 %v1376, %v1394
        %v1404 = vmax.f32 %v1377, %v1395
        %v1405 = vmax.f32 %v1378, %v1396
        %v1406 = vmax.f32 %v1379, %v1397
        %v1407 = vmax.f32 %v1380, %v1392
        %1413 = vrot.lane.b32.xlu0 %v1403, 19
        %v1414 = vpop.permute.xlu0 %1413
        %1415 = vrot.lane.b32.xlu0 %v1404, 19
        %v1416 = vpop.permute.xlu0 %1415
        %1417 = vrot.lane.b32.xlu0 %v1405, 19
        %v1418 = vpop.permute.xlu0 %1417
        %1419 = vrot.lane.b32.xlu0 %v1406, 19
        %v1420 = vpop.permute.xlu0 %1419
        %1421 = vrot.lane.b32.xlu0 %v1407, 19
        %v1422 = vpop.permute.xlu0 %1421
        %vm1423 = vcmask 154624
        %v1424 = vsel %vm1423, %v1414, %v1416
        %v1425 = vsel %vm1423, %v1416, %v1418
        %v1426 = vsel %vm1423, %v1418, %v1420
        %v1427 = vsel %vm1423, %v1420, %v1422
        %vm1433 = vcmask 162816
        %v1434 = vsel %vm1433, 0.0, %v1414
        %v1435 = vsel %vm1433, %v1427, 0.0
        %1436 = vrot.lane.b32.xlu0 %v1403, 127
        %v1437 = vpop.permute.xlu0 %1436
        %1438 = vrot.lane.b32.xlu0 %v1404, 127
        %v1439 = vpop.permute.xlu0 %1438
        %1440 = vrot.lane.b32.xlu0 %v1405, 127
        %v1441 = vpop.permute.xlu0 %1440
        %1442 = vrot.lane.b32.xlu0 %v1406, 127
        %v1443 = vpop.permute.xlu0 %1442
        %1444 = vrot.lane.b32.xlu0 %v1407, 127
        %v1445 = vpop.permute.xlu0 %1444
        %vm1446 = vcmask 1039360
        %v1447 = vsel %vm1446, %v1437, %v1439
        %v1448 = vsel %vm1446, %v1439, %v1441
        %v1449 = vsel %vm1446, %v1441, %v1443
        %v1450 = vsel %vm1446, %v1443, %v1445
        %v1455 = vmax.f32 %v1434, %v1447
        %v1456 = vmax.f32 %v1424, %v1448
        %v1457 = vmax.f32 %v1425, %v1449
        %v1458 = vmax.f32 %v1426, %v1450
        %1461 = vrot.lane.b32.xlu0 %v1434, 88
        %v1462 = vpop.permute.xlu0 %1461
        %1463 = vrot.lane.b32.xlu0 %v1424, 88
        %v1464 = vpop.permute.xlu0 %1463
        %1465 = vrot.lane.b32.xlu0 %v1425, 88
        %v1466 = vpop.permute.xlu0 %1465
        %1467 = vrot.lane.b32.xlu0 %v1426, 88
        %v1468 = vpop.permute.xlu0 %1467
        %1469 = vrot.lane.b32.xlu0 %v1435, 88
        %v1470 = vpop.permute.xlu0 %1469
        %vm1471 = vcmask 719872
        %v1472 = vsel %vm1471, %v1462, %v1464
        %v1473 = vsel %vm1471, %v1464, %v1466
        %v1474 = vsel %vm1471, %v1466, %v1468
        %v1475 = vsel %vm1471, %v1468, %v1470
        %v1480 = vmax.f32 %v1455, %v1472
        %v1481 = vmax.f32 %v1456, %v1473
        %v1482 = vmax.f32 %v1457, %v1474
        %v1483 = vmax.f32 %v1458, %v1475
        %v1484 = vsel %vm1322, %v1480, 0.0
        %v1485 = vsel %vm1323, %v1481, 0.0
        %v1486 = vsel %vm1324, %v1482, 0.0
        %v1487 = vsel %vm1325, %v1483, 0.0
        %v1488 = vpack.c.bf16 %v1484, %v1484
        %v1489 = vpack.c.bf16 %v1485, %v1485
        %v1490 = vpack.c.bf16 %v1486, %v1486
        %v1491 = vpack.c.bf16 %v1487, %v1487
        %v1496 = vrot.slane %v1488, 2
        %v1497 = vrot.slane %v1489, 2
        %v1498 = vrot.slane %v1490, 2
        %v1499 = vrot.slane %v1491, 2
        %1504 = vst [vmem:[#allocation2 + $0x100] sm:$0xc0] %v1496
        %1505 = vst [vmem:[#allocation2 + $0x108] sm:$0xc0] %v1497
        %1506 = vst [vmem:[#allocation2 + $0x110] sm:$0xc0] %v1498
        %1507 = vst [vmem:[#allocation2 + $0x118] sm:$0xc0] %v1499
        %v1508 = vld [vmem:[%s5] sm:$0xff]
        %v1509 = vld [vmem:[%s5 + $0x8] sm:$0xff]
        %v1510 = vld [vmem:[%s5 + $0x10] sm:$0xff]
        %v1511 = vld [vmem:[#allocation2] sm:$0xff]
        %v1512 = vld [vmem:[#allocation2 + $0x8] sm:$0xff]
        %v1513 = vld [vmem:[#allocation2 + $0x10] sm:$0xff]
        %v1514 = vld [vmem:[#allocation2 + $0x18] sm:$0xff]
        %v1515 = vld [vmem:[#allocation2 + $0x20] sm:$0xff]
        %v1516 = vld [vmem:[#allocation2 + $0x28] sm:$0xff]
        %v1517 = vld [vmem:[#allocation2 + $0x30] sm:$0xff]
        %v1518 = vld [vmem:[#allocation2 + $0x38] sm:$0xff]
        %v1519 = vld [vmem:[#allocation2 + $0x40] sm:$0xff]
        %v1520 = vld [vmem:[#allocation2 + $0x48] sm:$0xff]
        %v1521 = vld [vmem:[#allocation2 + $0x50] sm:$0xff]
        %v1522 = vld [vmem:[#allocation2 + $0x58] sm:$0xff]
        %v1523 = vld [vmem:[#allocation2 + $0x60] sm:$0xff]
        %v1524 = vld [vmem:[#allocation2 + $0x68] sm:$0xff]
        %v1525 = vld [vmem:[#allocation2 + $0x70] sm:$0xff]
        %v1526 = vld [vmem:[#allocation2 + $0x78] sm:$0xff]
        %v1527 = vld [vmem:[#allocation2 + $0x80] sm:$0xff]
        %v1528 = vld [vmem:[#allocation2 + $0x88] sm:$0xff]
        %v1529 = vld [vmem:[#allocation2 + $0x90] sm:$0xff]
        %v1530 = vld [vmem:[#allocation2 + $0x98] sm:$0xff]
        %v1531 = vld [vmem:[#allocation2 + $0xa0] sm:$0xff]
        %v1532 = vld [vmem:[#allocation2 + $0xa8] sm:$0xff]
        %v1533 = vld [vmem:[#allocation2 + $0xb0] sm:$0xff]
        %v1534 = vld [vmem:[#allocation2 + $0xb8] sm:$0xff]
        %v1535 = vld [vmem:[#allocation2 + $0xc0] sm:$0xff]
        %v1536 = vld [vmem:[#allocation2 + $0xc8] sm:$0xff]
        %v1537 = vld [vmem:[#allocation2 + $0xd0] sm:$0xff]
        %v1538 = vld [vmem:[#allocation2 + $0xd8] sm:$0xff]
        %v1539 = vld [vmem:[#allocation2 + $0xe0] sm:$0xff]
        %v1540 = vld [vmem:[#allocation2 + $0xe8] sm:$0xff]
        %v1541 = vld [vmem:[#allocation2 + $0xf0] sm:$0xff]
        %v1542 = vld [vmem:[#allocation2 + $0xf8] sm:$0xff]
        %v1543 = vld [vmem:[#allocation2 + $0x100] sm:$0xff]
        %v1544 = vld [vmem:[#allocation2 + $0x108] sm:$0xff]
        %v1545 = vld [vmem:[#allocation2 + $0x110] sm:$0xff]
        %v1546 = vld [vmem:[#allocation2 + $0x118] sm:$0xff]
        %v1550 = vunpack.c.l.b16 %v1508
        %v1551 = vunpack.c.h.b16 %v1508
        %v1552 = vunpack.c.l.b16 %v1509
        %v1553 = vunpack.c.h.b16 %v1509
        %v1554 = vunpack.c.l.b16 %v1510
        %v1555 = vunpack.c.h.b16 %v1510
        %v1556 = vpack.c.b16 %v1552, %v1550
        %v1557 = vpack.c.b16 %v1553, %v1551
        %v1558 = vpack.c.b16 %v1554, %v1554
        %v1559 = vpack.c.b16 %v1555, %v1555
        %vm1562 = vcmask 130048
        %v1564 = vsel %vm1562, %v1557, 0
        %v1567 = vsel %vm1562, %v1559, 0
        %1569 = vmatprep.subr.bf16.mxu0 %v1512
        %1570 = vmatpush1.bf16.msra.mxu0 %v1511
        %1571 = vmatprep.subr.bf16.mxu0 %v1516
        %1572 = vmatpush1.bf16.msra.mxu0 %v1515
        %1573 = vmatprep.subr.bf16.mxu0 %v1520
        %1574 = vmatpush1.bf16.msra.mxu0 %v1519
        %1575 = vmatprep.subr.bf16.mxu0 %v1524
        %1576 = vmatpush1.bf16.msra.mxu0 %v1523
        %1577 = vmatprep.subr.bf16.mxu0 %v1528
        %1578 = vmatpush1.bf16.msra.mxu0 %v1527
        %1579 = vmatprep.subr.bf16.mxu0 %v1532
        %1580 = vmatpush1.bf16.msra.mxu0 %v1531
        %1581 = vmatprep.subr.bf16.mxu0 %v1536
        %1582 = vmatpush1.bf16.msra.mxu0 %v1535
        %1583 = vmatprep.subr.bf16.mxu0 %v1540
        %1584 = vmatpush1.bf16.msra.mxu0 %v1539
        %1585 = vmatprep.subr.bf16.mxu0 %v1544
        %1586 = vmatpush1.bf16.msra.mxu0 %v1543
        %1587 = vmatprep.subr.bf16.mxu0 0
        %1588 = vmatpush1.bf16.msra.mxu0 0
        %1589 = vmatprep.subr.bf16.mxu0 0
        %1590 = vmatpush1.bf16.msra.mxu0 0
        %1591 = vmatprep.subr.bf16.mxu0 0
        %1592 = vmatpush1.bf16.msra.mxu0 0
        %1593 = vmatprep.subr.bf16.mxu0 0
        %1594 = vmatpush1.bf16.msra.mxu0 0
        %1595 = vmatprep.subr.bf16.mxu0 0
        %1596 = vmatpush1.bf16.msra.mxu0 0
        %1597 = vmatprep.subr.bf16.mxu0 0
        %1598 = vmatpush1.bf16.msra.mxu0 0
        %1599 = vmatprep.subr.bf16.mxu0 0
        %1600 = vmatpush1.bf16.msra.mxu0 0
        %1601 = vmatprep.mubr.bf16.mxu0 %v1564
        %1602 = vmatmul.mubr.bf16.gmra.mrb[0].mxu0 %v1556
        %v1603 = vpop.f32.mrb[0].mxu0
        %v1604 = vadd.f32 0.0, %v1603
        %v1605 = vpop.f32.mrb[0].mxu0
        %v1606 = vadd.f32 0.0, %v1605
        %v1607 = vpop.f32.mrb[0].mxu0
        %v1608 = vadd.f32 0.0, %v1607
        %v1609 = vpop.f32.mrb[0].mxu0
        %v1610 = vadd.f32 0.0, %v1609
        %1611 = vmatprep.mubr.bf16.mxu0 %v1567
        %1612 = vmatmul.mubr.bf16.gmra.mrb[0].mxu0 %v1558
        %v1613 = vpop.f32.mrb[0].mxu0
        %v1614 = vadd.f32 0.0, %v1613
        %v1615 = vpop.f32.mrb[0].mxu0
        %v1616 = vadd.f32 0.0, %v1615
        %v1617 = vpop.f32.mrb[0].mxu0
        %v1618 = vpop.f32.mrb[0].mxu0
        %1619 = vdwg.mxu0
        %1620 = vmatprep.subr.bf16.mxu0 %v1514
        %1621 = vmatpush1.bf16.msra.mxu0 %v1513
        %1622 = vmatprep.subr.bf16.mxu0 %v1518
        %1623 = vmatpush1.bf16.msra.mxu0 %v1517
        %1624 = vmatprep.subr.bf16.mxu0 %v1522
        %1625 = vmatpush1.bf16.msra.mxu0 %v1521
        %1626 = vmatprep.subr.bf16.mxu0 %v1526
        %1627 = vmatpush1.bf16.msra.mxu0 %v1525
        %1628 = vmatprep.subr.bf16.mxu0 %v1530
        %1629 = vmatpush1.bf16.msra.mxu0 %v1529
        %1630 = vmatprep.subr.bf16.mxu0 %v1534
        %1631 = vmatpush1.bf16.msra.mxu0 %v1533
        %1632 = vmatprep.subr.bf16.mxu0 %v1538
        %1633 = vmatpush1.bf16.msra.mxu0 %v1537
        %1634 = vmatprep.subr.bf16.mxu0 %v1542
        %1635 = vmatpush1.bf16.msra.mxu0 %v1541
        %1636 = vmatprep.subr.bf16.mxu0 %v1546
        %1637 = vmatpush1.bf16.msra.mxu0 %v1545
        %1638 = vmatprep.subr.bf16.mxu0 0
        %1639 = vmatpush1.bf16.msra.mxu0 0
        %1640 = vmatprep.subr.bf16.mxu0 0
        %1641 = vmatpush1.bf16.msra.mxu0 0
        %1642 = vmatprep.subr.bf16.mxu0 0
        %1643 = vmatpush1.bf16.msra.mxu0 0
        %1644 = vmatprep.subr.bf16.mxu0 0
        %1645 = vmatpush1.bf16.msra.mxu0 0
        %1646 = vmatprep.subr.bf16.mxu0 0
        %1647 = vmatpush1.bf16.msra.mxu0 0
        %1648 = vmatprep.subr.bf16.mxu0 0
        %1649 = vmatpush1.bf16.msra.mxu0 0
        %1650 = vmatprep.subr.bf16.mxu0 0
        %1651 = vmatpush1.bf16.msra.mxu0 0
        %1652 = vmatprep.mubr.bf16.mxu0 %v1564
        %1653 = vmatmul.mubr.bf16.gmra.mrb[0].mxu0 %v1556
        %v1654 = vpop.f32.mrb[0].mxu0
        %v1655 = vadd.f32 0.0, %v1654
        %v1656 = vpop.f32.mrb[0].mxu0
        %v1657 = vadd.f32 0.0, %v1656
        %v1658 = vpop.f32.mrb[0].mxu0
        %v1659 = vadd.f32 0.0, %v1658
        %v1660 = vpop.f32.mrb[0].mxu0
        %v1661 = vadd.f32 0.0, %v1660
        %1662 = vmatprep.mubr.bf16.mxu0 %v1567
        %1663 = vmatmul.mubr.bf16.gmra.mrb[0].mxu0 %v1558
        %v1664 = vpop.f32.mrb[0].mxu0
        %v1665 = vadd.f32 0.0, %v1664
        %v1666 = vpop.f32.mrb[0].mxu0
        %v1667 = vadd.f32 0.0, %v1666
        %v1668 = vpop.f32.mrb[0].mxu0
        %v1669 = vpop.f32.mrb[0].mxu0
        %1670 = vdwg.mxu0
        %v1671 = vld [vmem:[%s6] sm:$0xff]
        %v1672 = vld [vmem:[%s6 + $0x8] sm:$0xff]
        %v1673 = vld [vmem:[%s6 + $0x10] sm:$0xff]
        %1675 = vset.pattern.permute.xlu0 0
        %1676 = vperm.xlu0 %1675, %v1671
        %v1677 = vpop.permute.xlu0 %1676
        %1680 = vset.pattern.permute.xlu0 0
        %1681 = vperm.xlu0 %1680, %v1672
        %v1682 = vpop.permute.xlu0 %1681
        %1685 = vset.pattern.permute.xlu0 0
        %1686 = vperm.xlu0 %1685, %v1673
        %v1687 = vpop.permute.xlu0 %1686
        %v1689 = vmul.f32 %v1604, %v1677
        %v1690 = vmul.f32 %v1606, %v1677
        %v1691 = vmul.f32 %v1655, %v1677
        %v1692 = vmul.f32 %v1657, %v1677
        %v1693 = vmul.f32 %v1608, %v1682
        %v1694 = vmul.f32 %v1610, %v1682
        %v1695 = vmul.f32 %v1659, %v1682
        %v1696 = vmul.f32 %v1661, %v1682
        %v1697 = vmul.f32 %v1614, %v1687
        %v1698 = vmul.f32 %v1616, %v1687
        %v1699 = vmul.f32 %v1665, %v1687
        %v1700 = vmul.f32 %v1667, %v1687
        %v1701 = vld [vmem:[%s7] sm:$0xff]
        %v1702 = vld [vmem:[%s7 + $0x8] sm:$0xff]
        %v1703 = vld [vmem:[%s7 + $0x10] sm:$0xff]
        %1705 = vset.pattern.permute.xlu0 0
        %1706 = vperm.xlu0 %1705, %v1701
        %v1707 = vpop.permute.xlu0 %1706
        %1710 = vset.pattern.permute.xlu0 0
        %1711 = vperm.xlu0 %1710, %v1702
        %v1712 = vpop.permute.xlu0 %1711
        %1715 = vset.pattern.permute.xlu0 0
        %1716 = vperm.xlu0 %1715, %v1703
        %v1717 = vpop.permute.xlu0 %1716
        %v1719 = vadd.f32 %v1689, %v1707
        %v1720 = vadd.f32 %v1690, %v1707
        %v1721 = vadd.f32 %v1691, %v1707
        %v1722 = vadd.f32 %v1692, %v1707
        %v1723 = vadd.f32 %v1693, %v1712
        %v1724 = vadd.f32 %v1694, %v1712
        %v1725 = vadd.f32 %v1695, %v1712
        %v1726 = vadd.f32 %v1696, %v1712
        %v1727 = vadd.f32 %v1697, %v1717
        %v1728 = vadd.f32 %v1698, %v1717
        %v1729 = vadd.f32 %v1699, %v1717
        %v1730 = vadd.f32 %v1700, %v1717
        %v1731 = vmax.f32 %v1719, 0.0
        %v1732 = vmax.f32 %v1720, 0.0
        %v1733 = vmax.f32 %v1721, 0.0
        %v1734 = vmax.f32 %v1722, 0.0
        %v1735 = vmax.f32 %v1723, 0.0
        %v1736 = vmax.f32 %v1724, 0.0
        %v1737 = vmax.f32 %v1725, 0.0
        %v1738 = vmax.f32 %v1726, 0.0
        %v1739 = vmax.f32 %v1727, 0.0
        %v1740 = vmax.f32 %v1728, 0.0
        %v1741 = vmax.f32 %v1729, 0.0
        %v1742 = vmax.f32 %v1730, 0.0
        %1743 = vst [vmem:[%s298] sm:$0xff] %v1731
        %1744 = vst [vmem:[%s298 + $0x8] sm:$0xff] %v1732
        %1745 = vst [vmem:[%s298 + $0x10] sm:$0xff] %v1733
        %1746 = vst [vmem:[%s298 + $0x18] sm:$0xff] %v1734
        %1747 = vst [vmem:[%s298 + $0x20] sm:$0xff] %v1735
        %1748 = vst [vmem:[%s298 + $0x28] sm:$0xff] %v1736
        %1749 = vst [vmem:[%s298 + $0x30] sm:$0xff] %v1737
        %1750 = vst [vmem:[%s298 + $0x38] sm:$0xff] %v1738
        %1751 = vst [vmem:[%s298 + $0x40] sm:$0xff] %v1739
        %1752 = vst [vmem:[%s298 + $0x48] sm:$0xff] %v1740
        %1753 = vst [vmem:[%s298 + $0x50] sm:$0xff] %v1741
        %1754 = vst [vmem:[%s298 + $0x58] sm:$0xff] %v1742
        %s1755 = sand.u32 %s203, 1
        %s1756 = scalar_lea.sflag [#allocation4], %s1755
        %s1757 = sand.u32 %s203, 1
        %s1758 = smul.addr %s1757, 96
        %s1759 = scalar_lea.vmem [#allocation3], %s1758
        // Predicated region
        $region53: #{tpu_custom_call.1} parent=51 // pred_check
          %p1760 = pneg %p213
        $region54: #{tpu_custom_call.1} parent=51 // pred_check_branch
          %1762 = sbr.rel (%p1760) target = $region56
        $region55: #{tpu_custom_call.1} parent=51 // pred_region
          %s1764 = ssub.s32 1536, 1536
          %1765 = vsyncadd %s1756, %s1764
          %s1766 = smul.addr %s22, 12
          %s1767 = smul.addr %s1766, 128
          %s1768 = scalar_lea.hbm %s8, %s1767
          %s1769 = sshll.u32 %s1759, 4
          %s1770 = int_to_ptr.vmem [resolvable:$true] %s1769
          %1775 = dma.vmem_to_hbm [thread:$0]  %s1770, 1536, %s1768, %s1756, 512, 512, 32
        $region56: #{tpu_custom_call.1} parent=51 // pred_fallthru
          _
      $region52: #{tpu_custom_call.1} parent=5 // pred_fallthru
        _
      %p1776 = scmp.le.s32.totalorder 2, %s17
      // Predicated region
      $region57: #{tpu_custom_call.1} parent=5 // pred_check
        %p1777 = pneg %p1776
      $region58: #{tpu_custom_call.1} parent=5 // pred_check_branch
        %1779 = sbr.rel (%p1777) target = $region60
      $region59: #{tpu_custom_call.1} parent=5 // pred_region
        %s1780 = ssub.s32 %s17, 2
        // Predicated region
        $region61: #{tpu_custom_call.1} parent=59 // pred_check
          %p1781 = pneg %p219
        $region62: #{tpu_custom_call.1} parent=59 // pred_check_branch
          %1783 = sbr.rel (%p1781) target = $region64
        $region63: #{tpu_custom_call.1} parent=59 // pred_region
          %s1784 = sand.u32 %s204, 1
          %s1785 = scalar_lea.sflag [#allocation4], %s1784
          %s1786 = sand.u32 %s204, 1
          %s1787 = smul.addr %s1786, 96
          %s1788 = scalar_lea.vmem [#allocation3], %s1787
          %1789 = dma.done %s1785, 1536
        $region64: #{tpu_custom_call.1} parent=59 // pred_fallthru
          _
      $region60: #{tpu_custom_call.1} parent=5 // pred_fallthru
        _
    $region6: #{tpu_custom_call.1} parent=1 // loop_footer
      %s21 = sadd.s32 1, %s17
    $region7: #{tpu_custom_call.1} parent=1 // loop_footer_branch
      %16 = sbr.rel target = $region3
    $region8: #{tpu_custom_call.1} parent=1 // loop_exit
      _
    %1790 = vsyncpa [#allocation4], 1
    %s1791 = scalar_lea.sflag [#allocation4], 1
    %1792 = vsyncpa %s1791, 1

</llo_original>
